<compile_context>
chip_gen: v7x
topology: tpu7x:2x2x1
jax: 0.10.0
libtpu: 0.0.40
codegen_flags: <defaults>
</compile_context>

<pallas_src>
import jax
import jax.numpy as jnp
from jax.experimental import pallas as pl
from jax.experimental.pallas import tpu as pltpu

# ---------------- small config (consistent with the module) ----------------
B = 2
IN_CHANS = 4
IMG = 16
PATCH = 8                                 # stride == kernel size
EMBED = 256                               # multiple of 256 -> native MXU N tile, lane-dense

GH = IMG // PATCH                         # 2
GW = IMG // PATCH                         # 2
NUM_PATCHES = GH * GW                     # 4
PATCH_DIM = IN_CHANS * PATCH * PATCH      # 256  (K aligned -> no padded MXU pass)


def patch_embed_kernel(x_ref, w_ref, b_ref, o_ref, p_ref):
    """One batch element per grid step.

    x_ref: (1, C, IMG, IMG) f32      raw NCHW image block (no wrapper im2col)
    w_ref: (PATCH_DIM, EMBED) bf16   VMEM-resident projection weight
    b_ref: (1, EMBED) f32            VMEM-resident bias
    o_ref: (1, NUM_PATCHES, EMBED) f32
    p_ref: (NUM_PATCHES, PATCH_DIM) f32 VMEM scratch (im2col patch matrix)
    """
    # ---- in-VMEM im2col -----------------------------------------------------
    # patches[gh*GW + gw, (c*P + ph)*P + pw] = x[c, gh*P + ph, gw*P + pw]
    # Built from fully-static contiguous 2-D slice copies only (no in-kernel
    # transpose / reshape / strided access). Every element of p_ref is
    # overwritten each grid step, so no stale data reaches the matmul.
    # TODO(synk): at real ViT sizes (C=3, P=16, 14x14 grid) coarsen this to
    # per-(c, ph) slab copies via pl.ds(..., stride=PATCH) or a (B, GH) band
    # grid instead of fully unrolled per-patch copies.
    for c in range(IN_CHANS):
        for ph in range(PATCH):
            col = (c * PATCH + ph) * PATCH
            for gh in range(GH):
                src_row = gh * PATCH + ph
                for gw in range(GW):
                    dst_row = gh * GW + gw
                    p_ref[dst_row:dst_row + 1, col:col + PATCH] = (
                        x_ref[0, c, src_row:src_row + 1,
                              gw * PATCH:(gw + 1) * PATCH]
                    )

    # ---- projection: single MXU matmul, bf16 operands, f32 accumulation -----
    acc = jnp.dot(
        p_ref[...].astype(jnp.bfloat16),
        w_ref[...],
        preferred_element_type=jnp.float32,
    )
    # f32 epilogue (bias add) -> cheap on all generations incl. v5e.
    o_ref[0] = (acc + b_ref[...]).astype(o_ref.dtype)


def patch_embed_forward(x, weight, bias):
    """x: (B, C, IMG, IMG) f32; weight: (EMBED, C, PATCH, PATCH); bias: (EMBED,)."""
    # Reordering/casting the weight is tiny one-off plumbing (K*E elements);
    # bf16 weight halves its resident VMEM copy and hits the native MXU path.
    w = weight.reshape(EMBED, PATCH_DIM).T.astype(jnp.bfloat16)   # (K, E)
    bias2d = bias.reshape(1, EMBED).astype(jnp.float32)

    flops = 2 * B * NUM_PATCHES * PATCH_DIM * EMBED
    bytes_accessed = (
        x.size * x.dtype.itemsize
        + w.size * w.dtype.itemsize
        + bias2d.size * bias2d.dtype.itemsize
        + B * NUM_PATCHES * EMBED * 4
    )

    out = pl.pallas_call(
        patch_embed_kernel,
        out_shape=jax.ShapeDtypeStruct((B, NUM_PATCHES, EMBED), jnp.float32),
        grid=(B,),
        in_specs=[
            # one image per grid step; last two dims full -> valid block shape
            pl.BlockSpec((1, IN_CHANS, IMG, IMG), lambda i: (i, 0, 0, 0)),
            # constant index maps -> weight / bias stay resident across steps
            pl.BlockSpec((PATCH_DIM, EMBED), lambda i: (0, 0)),
            pl.BlockSpec((1, EMBED), lambda i: (0, 0)),
        ],
        out_specs=pl.BlockSpec((1, NUM_PATCHES, EMBED), lambda i: (i, 0, 0)),
        scratch_shapes=[pltpu.VMEM((NUM_PATCHES, PATCH_DIM), jnp.float32)],
        compiler_params=pltpu.CompilerParams(
            # batch axis is independent -> shard across v7x's 2 TensorCores
            dimension_semantics=("parallel",),
            # safe on v5e/v6e (128 MiB) and v7x (64 MiB); leaves large headroom
            vmem_limit_bytes=32 * 1024 * 1024,
        ),
        cost_estimate=pl.CostEstimate(
            flops=flops, transcendentals=0, bytes_accessed=bytes_accessed),
    )(x, w, bias2d)

    # Rows are already in (gh*GW + gw) order == conv(x).flatten(2).transpose(1, 2)
    return out


if __name__ == "__main__":
    key = jax.random.PRNGKey(0)
    kx, kw, kb = jax.random.split(key, 3)
    x = jax.random.normal(kx, (B, IN_CHANS, IMG, IMG), dtype=jnp.float32)
    weight = (jax.random.normal(kw, (EMBED, IN_CHANS, PATCH, PATCH)) * 0.02).astype(jnp.float32)
    bias = (jax.random.normal(kb, (EMBED,)) * 0.02).astype(jnp.float32)

    out = patch_embed_forward(x, weight, bias)
    jax.block_until_ready(out)
    assert out.shape == (B, NUM_PATCHES, EMBED) and out.dtype == jnp.float32

    # Reference: XLA conv on the SAME bf16-rounded operands (f32 accumulation),
    # so the check stays tight while matching the kernel's bf16 MXU path.
    x_r = x.astype(jnp.bfloat16).astype(jnp.float32)
    w_r = weight.astype(jnp.bfloat16).astype(jnp.float32)
    ref = jax.lax.conv_general_dilated(
        x_r, w_r, window_strides=(PATCH, PATCH), padding="VALID",
        dimension_numbers=("NCHW", "OIHW", "NCHW"),
        precision=jax.lax.Precision.HIGHEST,
    )                                                 # (B, EMBED, GH, GW)
    ref = ref.reshape(B, EMBED, NUM_PATCHES).transpose(0, 2, 1) + bias.reshape(1, 1, EMBED)
    max_err = float(jnp.max(jnp.abs(out - ref)))
    assert jnp.allclose(out, ref, rtol=2e-3, atol=2e-3), max_err

    print("KERNEL_OK")
</pallas_src>

<mosaic_0001>
module attributes {stable_mosaic.version = 11 : i64} {
  func.func @patch_embed_kernel(%arg0: i32, %arg1: memref<1x4x16x16xf32, #tpu.memory_space<vmem>>, %arg2: memref<256x256xbf16, #tpu.memory_space<vmem>>, %arg3: memref<1x256xf32, #tpu.memory_space<vmem>>, %arg4: memref<1x4x256xf32, #tpu.memory_space<vmem>>, %arg5: memref<4x256xf32, #tpu.memory_space<vmem>>) attributes {dimension_semantics = [#tpu.dimension_semantics<parallel>], iteration_bounds = array<i64: 2>, scalar_prefetch = 0 : i64, scratch_operands = 1 : i64, tpu.core_type = #tpu.core_type<tc>, window_params = [{transform_indices = @transform_0, window_bounds = array<i64: 1, 4, 16, 16>}, {pipeline_mode = #tpu.pipeline_mode<synchronous>, transform_indices = @transform_1, window_bounds = array<i64: 256, 256>}, {pipeline_mode = #tpu.pipeline_mode<synchronous>, transform_indices = @transform_2, window_bounds = array<i64: 1, 256>}, {transform_indices = @transform_3, window_bounds = array<i64: 1, 4, 256>}]} {
    %c0 = arith.constant 0 : index
    %c0_0 = arith.constant 0 : index
    %c0_1 = arith.constant 0 : index
    %c0_2 = arith.constant 0 : index
    %0 = vector.load %arg1[%c0, %c0_0, %c0_1, %c0_2] : memref<1x4x16x16xf32, #tpu.memory_space<vmem>>, vector<1x1x1x8xf32>
    %1 = vector.shape_cast %0 : vector<1x1x1x8xf32> to vector<1x8xf32>
    %c0_3 = arith.constant 0 : index
    %c0_4 = arith.constant 0 : index
    %2 = vector.load %arg5[%c0_3, %c0_4] : memref<4x256xf32, #tpu.memory_space<vmem>>, vector<1x8xf32>
    tpu.vector_store %arg5[%c0_3, %c0_4], %1 {strides = array<i32>} : memref<4x256xf32, #tpu.memory_space<vmem>>, vector<1x8xf32>,
    %c0_5 = arith.constant 0 : index
    %c0_6 = arith.constant 0 : index
    %c0_7 = arith.constant 0 : index
    %c8 = arith.constant 8 : index
    %3 = vector.load %arg1[%c0_5, %c0_6, %c0_7, %c8] : memref<1x4x16x16xf32, #tpu.memory_space<vmem>>, vector<1x1x1x8xf32>
    %4 = vector.shape_cast %3 : vector<1x1x1x8xf32> to vector<1x8xf32>
    %c1 = arith.constant 1 : index
    %c0_8 = arith.constant 0 : index
    %5 = vector.load %arg5[%c1, %c0_8] : memref<4x256xf32, #tpu.memory_space<vmem>>, vector<1x8xf32>
    tpu.vector_store %arg5[%c1, %c0_8], %4 {strides = array<i32>} : memref<4x256xf32, #tpu.memory_space<vmem>>, vector<1x8xf32>,
    %c0_9 = arith.constant 0 : index
    %c0_10 = arith.constant 0 : index
    %c8_11 = arith.constant 8 : index
    %c0_12 = arith.constant 0 : index
    %6 = vector.load %arg1[%c0_9, %c0_10, %c8_11, %c0_12] : memref<1x4x16x16xf32, #tpu.memory_space<vmem>>, vector<1x1x1x8xf32>
    %7 = vector.shape_cast %6 : vector<1x1x1x8xf32> to vector<1x8xf32>
    %c2 = arith.constant 2 : index
    %c0_13 = arith.constant 0 : index
    %8 = vector.load %arg5[%c2, %c0_13] : memref<4x256xf32, #tpu.memory_space<vmem>>, vector<1x8xf32>
    tpu.vector_store %arg5[%c2, %c0_13], %7 {strides = array<i32>} : memref<4x256xf32, #tpu.memory_space<vmem>>, vector<1x8xf32>,
    %c0_14 = arith.constant 0 : index
    %c0_15 = arith.constant 0 : index
    %c8_16 = arith.constant 8 : index
    %c8_17 = arith.constant 8 : index
    %9 = vector.load %arg1[%c0_14, %c0_15, %c8_16, %c8_17] : memref<1x4x16x16xf32, #tpu.memory_space<vmem>>, vector<1x1x1x8xf32>
    %10 = vector.shape_cast %9 : vector<1x1x1x8xf32> to vector<1x8xf32>
    %c3 = arith.constant 3 : index
    %c0_18 = arith.constant 0 : index
    %11 = vector.load %arg5[%c3, %c0_18] : memref<4x256xf32, #tpu.memory_space<vmem>>, vector<1x8xf32>
    tpu.vector_store %arg5[%c3, %c0_18], %10 {strides = array<i32>} : memref<4x256xf32, #tpu.memory_space<vmem>>, vector<1x8xf32>,
    %c0_19 = arith.constant 0 : index
    %c0_20 = arith.constant 0 : index
    %c1_21 = arith.constant 1 : index
    %c0_22 = arith.constant 0 : index
    %12 = vector.load %arg1[%c0_19, %c0_20, %c1_21, %c0_22] : memref<1x4x16x16xf32, #tpu.memory_space<vmem>>, vector<1x1x1x8xf32>
    %13 = vector.shape_cast %12 : vector<1x1x1x8xf32> to vector<1x8xf32>
    %c0_23 = arith.constant 0 : index
    %c8_24 = arith.constant 8 : index
    %14 = vector.load %arg5[%c0_23, %c8_24] : memref<4x256xf32, #tpu.memory_space<vmem>>, vector<1x8xf32>
    tpu.vector_store %arg5[%c0_23, %c8_24], %13 {strides = array<i32>} : memref<4x256xf32, #tpu.memory_space<vmem>>, vector<1x8xf32>,
    %c0_25 = arith.constant 0 : index
    %c0_26 = arith.constant 0 : index
    %c1_27 = arith.constant 1 : index
    %c8_28 = arith.constant 8 : index
    %15 = vector.load %arg1[%c0_25, %c0_26, %c1_27, %c8_28] : memref<1x4x16x16xf32, #tpu.memory_space<vmem>>, vector<1x1x1x8xf32>
    %16 = vector.shape_cast %15 : vector<1x1x1x8xf32> to vector<1x8xf32>
    %c1_29 = arith.constant 1 : index
    %c8_30 = arith.constant 8 : index
    %17 = vector.load %arg5[%c1_29, %c8_30] : memref<4x256xf32, #tpu.memory_space<vmem>>, vector<1x8xf32>
    tpu.vector_store %arg5[%c1_29, %c8_30], %16 {strides = array<i32>} : memref<4x256xf32, #tpu.memory_space<vmem>>, vector<1x8xf32>,
    %c0_31 = arith.constant 0 : index
    %c0_32 = arith.constant 0 : index
    %c9 = arith.constant 9 : index
    %c0_33 = arith.constant 0 : index
    %18 = vector.load %arg1[%c0_31, %c0_32, %c9, %c0_33] : memref<1x4x16x16xf32, #tpu.memory_space<vmem>>, vector<1x1x1x8xf32>
    %19 = vector.shape_cast %18 : vector<1x1x1x8xf32> to vector<1x8xf32>
    %c2_34 = arith.constant 2 : index
    %c8_35 = arith.constant 8 : index
    %20 = vector.load %arg5[%c2_34, %c8_35] : memref<4x256xf32, #tpu.memory_space<vmem>>, vector<1x8xf32>
    tpu.vector_store %arg5[%c2_34, %c8_35], %19 {strides = array<i32>} : memref<4x256xf32, #tpu.memory_space<vmem>>, vector<1x8xf32>,
    %c0_36 = arith.constant 0 : index
    %c0_37 = arith.constant 0 : index
    %c9_38 = arith.constant 9 : index
    %c8_39 = arith.constant 8 : index
    %21 = vector.load %arg1[%c0_36, %c0_37, %c9_38, %c8_39] : memref<1x4x16x16xf32, #tpu.memory_space<vmem>>, vector<1x1x1x8xf32>
    %22 = vector.shape_cast %21 : vector<1x1x1x8xf32> to vector<1x8xf32>
    %c3_40 = arith.constant 3 : index
    %c8_41 = arith.constant 8 : index
    %23 = vector.load %arg5[%c3_40, %c8_41] : memref<4x256xf32, #tpu.memory_space<vmem>>, vector<1x8xf32>
    tpu.vector_store %arg5[%c3_40, %c8_41], %22 {strides = array<i32>} : memref<4x256xf32, #tpu.memory_space<vmem>>, vector<1x8xf32>,
    %c0_42 = arith.constant 0 : index
    %c0_43 = arith.constant 0 : index
    %c2_44 = arith.constant 2 : index
    %c0_45 = arith.constant 0 : index
    %24 = vector.load %arg1[%c0_42, %c0_43, %c2_44, %c0_45] : memref<1x4x16x16xf32, #tpu.memory_space<vmem>>, vector<1x1x1x8xf32>
    %25 = vector.shape_cast %24 : vector<1x1x1x8xf32> to vector<1x8xf32>
    %c0_46 = arith.constant 0 : index
    %c16 = arith.constant 16 : index
    %26 = vector.load %arg5[%c0_46, %c16] : memref<4x256xf32, #tpu.memory_space<vmem>>, vector<1x8xf32>
    tpu.vector_store %arg5[%c0_46, %c16], %25 {strides = array<i32>} : memref<4x256xf32, #tpu.memory_space<vmem>>, vector<1x8xf32>,
    %c0_47 = arith.constant 0 : index
    %c0_48 = arith.constant 0 : index
    %c2_49 = arith.constant 2 : index
    %c8_50 = arith.constant 8 : index
    %27 = vector.load %arg1[%c0_47, %c0_48, %c2_49, %c8_50] : memref<1x4x16x16xf32, #tpu.memory_space<vmem>>, vector<1x1x1x8xf32>
    %28 = vector.shape_cast %27 : vector<1x1x1x8xf32> to vector<1x8xf32>
    %c1_51 = arith.constant 1 : index
    %c16_52 = arith.constant 16 : index
    %29 = vector.load %arg5[%c1_51, %c16_52] : memref<4x256xf32, #tpu.memory_space<vmem>>, vector<1x8xf32>
    tpu.vector_store %arg5[%c1_51, %c16_52], %28 {strides = array<i32>} : memref<4x256xf32, #tpu.memory_space<vmem>>, vector<1x8xf32>,
    %c0_53 = arith.constant 0 : index
    %c0_54 = arith.constant 0 : index
    %c10 = arith.constant 10 : index
    %c0_55 = arith.constant 0 : index
    %30 = vector.load %arg1[%c0_53, %c0_54, %c10, %c0_55] : memref<1x4x16x16xf32, #tpu.memory_space<vmem>>, vector<1x1x1x8xf32>
    %31 = vector.shape_cast %30 : vector<1x1x1x8xf32> to vector<1x8xf32>
    %c2_56 = arith.constant 2 : index
    %c16_57 = arith.constant 16 : index
    %32 = vector.load %arg5[%c2_56, %c16_57] : memref<4x256xf32, #tpu.memory_space<vmem>>, vector<1x8xf32>
    tpu.vector_store %arg5[%c2_56, %c16_57], %31 {strides = array<i32>} : memref<4x256xf32, #tpu.memory_space<vmem>>, vector<1x8xf32>,
    %c0_58 = arith.constant 0 : index
    %c0_59 = arith.constant 0 : index
    %c10_60 = arith.constant 10 : index
    %c8_61 = arith.constant 8 : index
    %33 = vector.load %arg1[%c0_58, %c0_59, %c10_60, %c8_61] : memref<1x4x16x16xf32, #tpu.memory_space<vmem>>, vector<1x1x1x8xf32>
    %34 = vector.shape_cast %33 : vector<1x1x1x8xf32> to vector<1x8xf32>
    %c3_62 = arith.constant 3 : index
    %c16_63 = arith.constant 16 : index
    %35 = vector.load %arg5[%c3_62, %c16_63] : memref<4x256xf32, #tpu.memory_space<vmem>>, vector<1x8xf32>
    tpu.vector_store %arg5[%c3_62, %c16_63], %34 {strides = array<i32>} : memref<4x256xf32, #tpu.memory_space<vmem>>, vector<1x8xf32>,
    %c0_64 = arith.constant 0 : index
    %c0_65 = arith.constant 0 : index
    %c3_66 = arith.constant 3 : index
    %c0_67 = arith.constant 0 : index
    %36 = vector.load %arg1[%c0_64, %c0_65, %c3_66, %c0_67] : memref<1x4x16x16xf32, #tpu.memory_space<vmem>>, vector<1x1x1x8xf32>
    %37 = vector.shape_cast %36 : vector<1x1x1x8xf32> to vector<1x8xf32>
    %c0_68 = arith.constant 0 : index
    %c24 = arith.constant 24 : index
    %38 = vector.load %arg5[%c0_68, %c24] : memref<4x256xf32, #tpu.memory_space<vmem>>, vector<1x8xf32>
    tpu.vector_store %arg5[%c0_68, %c24], %37 {strides = array<i32>} : memref<4x256xf32, #tpu.memory_space<vmem>>, vector<1x8xf32>,
    %c0_69 = arith.constant 0 : index
    %c0_70 = arith.constant 0 : index
    %c3_71 = arith.constant 3 : index
    %c8_72 = arith.constant 8 : index
    %39 = vector.load %arg1[%c0_69, %c0_70, %c3_71, %c8_72] : memref<1x4x16x16xf32, #tpu.memory_space<vmem>>, vector<1x1x1x8xf32>
    %40 = vector.shape_cast %39 : vector<1x1x1x8xf32> to vector<1x8xf32>
    %c1_73 = arith.constant 1 : index
    %c24_74 = arith.constant 24 : index
    %41 = vector.load %arg5[%c1_73, %c24_74] : memref<4x256xf32, #tpu.memory_space<vmem>>, vector<1x8xf32>
    tpu.vector_store %arg5[%c1_73, %c24_74], %40 {strides = array<i32>} : memref<4x256xf32, #tpu.memory_space<vmem>>, vector<1x8xf32>,
    %c0_75 = arith.constant 0 : index
    %c0_76 = arith.constant 0 : index
    %c11 = arith.constant 11 : index
    %c0_77 = arith.constant 0 : index
    %42 = vector.load %arg1[%c0_75, %c0_76, %c11, %c0_77] : memref<1x4x16x16xf32, #tpu.memory_space<vmem>>, vector<1x1x1x8xf32>
    %43 = vector.shape_cast %42 : vector<1x1x1x8xf32> to vector<1x8xf32>
    %c2_78 = arith.constant 2 : index
    %c24_79 = arith.constant 24 : index
    %44 = vector.load %arg5[%c2_78, %c24_79] : memref<4x256xf32, #tpu.memory_space<vmem>>, vector<1x8xf32>
    tpu.vector_store %arg5[%c2_78, %c24_79], %43 {strides = array<i32>} : memref<4x256xf32, #tpu.memory_space<vmem>>, vector<1x8xf32>,
    %c0_80 = arith.constant 0 : index
    %c0_81 = arith.constant 0 : index
    %c11_82 = arith.constant 11 : index
    %c8_83 = arith.constant 8 : index
    %45 = vector.load %arg1[%c0_80, %c0_81, %c11_82, %c8_83] : memref<1x4x16x16xf32, #tpu.memory_space<vmem>>, vector<1x1x1x8xf32>
    %46 = vector.shape_cast %45 : vector<1x1x1x8xf32> to vector<1x8xf32>
    %c3_84 = arith.constant 3 : index
    %c24_85 = arith.constant 24 : index
    %47 = vector.load %arg5[%c3_84, %c24_85] : memref<4x256xf32, #tpu.memory_space<vmem>>, vector<1x8xf32>
    tpu.vector_store %arg5[%c3_84, %c24_85], %46 {strides = array<i32>} : memref<4x256xf32, #tpu.memory_space<vmem>>, vector<1x8xf32>,
    %c0_86 = arith.constant 0 : index
    %c0_87 = arith.constant 0 : index
    %c4 = arith.constant 4 : index
    %c0_88 = arith.constant 0 : index
    %48 = vector.load %arg1[%c0_86, %c0_87, %c4, %c0_88] : memref<1x4x16x16xf32, #tpu.memory_space<vmem>>, vector<1x1x1x8xf32>
    %49 = vector.shape_cast %48 : vector<1x1x1x8xf32> to vector<1x8xf32>
    %c0_89 = arith.constant 0 : index
    %c32 = arith.constant 32 : index
    %50 = vector.load %arg5[%c0_89, %c32] : memref<4x256xf32, #tpu.memory_space<vmem>>, vector<1x8xf32>
    tpu.vector_store %arg5[%c0_89, %c32], %49 {strides = array<i32>} : memref<4x256xf32, #tpu.memory_space<vmem>>, vector<1x8xf32>,
    %c0_90 = arith.constant 0 : index
    %c0_91 = arith.constant 0 : index
    %c4_92 = arith.constant 4 : index
    %c8_93 = arith.constant 8 : index
    %51 = vector.load %arg1[%c0_90, %c0_91, %c4_92, %c8_93] : memref<1x4x16x16xf32, #tpu.memory_space<vmem>>, vector<1x1x1x8xf32>
    %52 = vector.shape_cast %51 : vector<1x1x1x8xf32> to vector<1x8xf32>
    %c1_94 = arith.constant 1 : index
    %c32_95 = arith.constant 32 : index
    %53 = vector.load %arg5[%c1_94, %c32_95] : memref<4x256xf32, #tpu.memory_space<vmem>>, vector<1x8xf32>
    tpu.vector_store %arg5[%c1_94, %c32_95], %52 {strides = array<i32>} : memref<4x256xf32, #tpu.memory_space<vmem>>, vector<1x8xf32>,
    %c0_96 = arith.constant 0 : index
    %c0_97 = arith.constant 0 : index
    %c12 = arith.constant 12 : index
    %c0_98 = arith.constant 0 : index
    %54 = vector.load %arg1[%c0_96, %c0_97, %c12, %c0_98] : memref<1x4x16x16xf32, #tpu.memory_space<vmem>>, vector<1x1x1x8xf32>
    %55 = vector.shape_cast %54 : vector<1x1x1x8xf32> to vector<1x8xf32>
    %c2_99 = arith.constant 2 : index
    %c32_100 = arith.constant 32 : index
    %56 = vector.load %arg5[%c2_99, %c32_100] : memref<4x256xf32, #tpu.memory_space<vmem>>, vector<1x8xf32>
    tpu.vector_store %arg5[%c2_99, %c32_100], %55 {strides = array<i32>} : memref<4x256xf32, #tpu.memory_space<vmem>>, vector<1x8xf32>,
    %c0_101 = arith.constant 0 : index
    %c0_102 = arith.constant 0 : index
    %c12_103 = arith.constant 12 : index
    %c8_104 = arith.constant 8 : index
    %57 = vector.load %arg1[%c0_101, %c0_102, %c12_103, %c8_104] : memref<1x4x16x16xf32, #tpu.memory_space<vmem>>, vector<1x1x1x8xf32>
    %58 = vector.shape_cast %57 : vector<1x1x1x8xf32> to vector<1x8xf32>
    %c3_105 = arith.constant 3 : index
    %c32_106 = arith.constant 32 : index
    %59 = vector.load %arg5[%c3_105, %c32_106] : memref<4x256xf32, #tpu.memory_space<vmem>>, vector<1x8xf32>
    tpu.vector_store %arg5[%c3_105, %c32_106], %58 {strides = array<i32>} : memref<4x256xf32, #tpu.memory_space<vmem>>, vector<1x8xf32>,
    %c0_107 = arith.constant 0 : index
    %c0_108 = arith.constant 0 : index
    %c5 = arith.constant 5 : index
    %c0_109 = arith.constant 0 : index
    %60 = vector.load %arg1[%c0_107, %c0_108, %c5, %c0_109] : memref<1x4x16x16xf32, #tpu.memory_space<vmem>>, vector<1x1x1x8xf32>
    %61 = vector.shape_cast %60 : vector<1x1x1x8xf32> to vector<1x8xf32>
    %c0_110 = arith.constant 0 : index
    %c40 = arith.constant 40 : index
    %62 = vector.load %arg5[%c0_110, %c40] : memref<4x256xf32, #tpu.memory_space<vmem>>, vector<1x8xf32>
    tpu.vector_store %arg5[%c0_110, %c40], %61 {strides = array<i32>} : memref<4x256xf32, #tpu.memory_space<vmem>>, vector<1x8xf32>,
    %c0_111 = arith.constant 0 : index
    %c0_112 = arith.constant 0 : index
    %c5_113 = arith.constant 5 : index
    %c8_114 = arith.constant 8 : index
    %63 = vector.load %arg1[%c0_111, %c0_112, %c5_113, %c8_114] : memref<1x4x16x16xf32, #tpu.memory_space<vmem>>, vector<1x1x1x8xf32>
    %64 = vector.shape_cast %63 : vector<1x1x1x8xf32> to vector<1x8xf32>
    %c1_115 = arith.constant 1 : index
    %c40_116 = arith.constant 40 : index
    %65 = vector.load %arg5[%c1_115, %c40_116] : memref<4x256xf32, #tpu.memory_space<vmem>>, vector<1x8xf32>
    tpu.vector_store %arg5[%c1_115, %c40_116], %64 {strides = array<i32>} : memref<4x256xf32, #tpu.memory_space<vmem>>, vector<1x8xf32>,
    %c0_117 = arith.constant 0 : index
    %c0_118 = arith.constant 0 : index
    %c13 = arith.constant 13 : index
    %c0_119 = arith.constant 0 : index
    %66 = vector.load %arg1[%c0_117, %c0_118, %c13, %c0_119] : memref<1x4x16x16xf32, #tpu.memory_space<vmem>>, vector<1x1x1x8xf32>
    %67 = vector.shape_cast %66 : vector<1x1x1x8xf32> to vector<1x8xf32>
    %c2_120 = arith.constant 2 : index
    %c40_121 = arith.constant 40 : index
    %68 = vector.load %arg5[%c2_120, %c40_121] : memref<4x256xf32, #tpu.memory_space<vmem>>, vector<1x8xf32>
    tpu.vector_store %arg5[%c2_120, %c40_121], %67 {strides = array<i32>} : memref<4x256xf32, #tpu.memory_space<vmem>>, vector<1x8xf32>,
    %c0_122 = arith.constant 0 : index
    %c0_123 = arith.constant 0 : index
    %c13_124 = arith.constant 13 : index
    %c8_125 = arith.constant 8 : index
    %69 = vector.load %arg1[%c0_122, %c0_123, %c13_124, %c8_125] : memref<1x4x16x16xf32, #tpu.memory_space<vmem>>, vector<1x1x1x8xf32>
    %70 = vector.shape_cast %69 : vector<1x1x1x8xf32> to vector<1x8xf32>
    %c3_126 = arith.constant 3 : index
    %c40_127 = arith.constant 40 : index
    %71 = vector.load %arg5[%c3_126, %c40_127] : memref<4x256xf32, #tpu.memory_space<vmem>>, vector<1x8xf32>
    tpu.vector_store %arg5[%c3_126, %c40_127], %70 {strides = array<i32>} : memref<4x256xf32, #tpu.memory_space<vmem>>, vector<1x8xf32>,
    %c0_128 = arith.constant 0 : index
    %c0_129 = arith.constant 0 : index
    %c6 = arith.constant 6 : index
    %c0_130 = arith.constant 0 : index
    %72 = vector.load %arg1[%c0_128, %c0_129, %c6, %c0_130] : memref<1x4x16x16xf32, #tpu.memory_space<vmem>>, vector<1x1x1x8xf32>
    %73 = vector.shape_cast %72 : vector<1x1x1x8xf32> to vector<1x8xf32>
    %c0_131 = arith.constant 0 : index
    %c48 = arith.constant 48 : index
    %74 = vector.load %arg5[%c0_131, %c48] : memref<4x256xf32, #tpu.memory_space<vmem>>, vector<1x8xf32>
    tpu.vector_store %arg5[%c0_131, %c48], %73 {strides = array<i32>} : memref<4x256xf32, #tpu.memory_space<vmem>>, vector<1x8xf32>,
    %c0_132 = arith.constant 0 : index
    %c0_133 = arith.constant 0 : index
    %c6_134 = arith.constant 6 : index
    %c8_135 = arith.constant 8 : index
    %75 = vector.load %arg1[%c0_132, %c0_133, %c6_134, %c8_135] : memref<1x4x16x16xf32, #tpu.memory_space<vmem>>, vector<1x1x1x8xf32>
    %76 = vector.shape_cast %75 : vector<1x1x1x8xf32> to vector<1x8xf32>
    %c1_136 = arith.constant 1 : index
    %c48_137 = arith.constant 48 : index
    %77 = vector.load %arg5[%c1_136, %c48_137] : memref<4x256xf32, #tpu.memory_space<vmem>>, vector<1x8xf32>
    tpu.vector_store %arg5[%c1_136, %c48_137], %76 {strides = array<i32>} : memref<4x256xf32, #tpu.memory_space<vmem>>, vector<1x8xf32>,
    %c0_138 = arith.constant 0 : index
    %c0_139 = arith.constant 0 : index
    %c14 = arith.constant 14 : index
    %c0_140 = arith.constant 0 : index
    %78 = vector.load %arg1[%c0_138, %c0_139, %c14, %c0_140] : memref<1x4x16x16xf32, #tpu.memory_space<vmem>>, vector<1x1x1x8xf32>
    %79 = vector.shape_cast %78 : vector<1x1x1x8xf32> to vector<1x8xf32>
    %c2_141 = arith.constant 2 : index
    %c48_142 = arith.constant 48 : index
    %80 = vector.load %arg5[%c2_141, %c48_142] : memref<4x256xf32, #tpu.memory_space<vmem>>, vector<1x8xf32>
    tpu.vector_store %arg5[%c2_141, %c48_142], %79 {strides = array<i32>} : memref<4x256xf32, #tpu.memory_space<vmem>>, vector<1x8xf32>,
    %c0_143 = arith.constant 0 : index
    %c0_144 = arith.constant 0 : index
    %c14_145 = arith.constant 14 : index
    %c8_146 = arith.constant 8 : index
    %81 = vector.load %arg1[%c0_143, %c0_144, %c14_145, %c8_146] : memref<1x4x16x16xf32, #tpu.memory_space<vmem>>, vector<1x1x1x8xf32>
    %82 = vector.shape_cast %81 : vector<1x1x1x8xf32> to vector<1x8xf32>
    %c3_147 = arith.constant 3 : index
    %c48_148 = arith.constant 48 : index
    %83 = vector.load %arg5[%c3_147, %c48_148] : memref<4x256xf32, #tpu.memory_space<vmem>>, vector<1x8xf32>
    tpu.vector_store %arg5[%c3_147, %c48_148], %82 {strides = array<i32>} : memref<4x256xf32, #tpu.memory_space<vmem>>, vector<1x8xf32>,
    %c0_149 = arith.constant 0 : index
    %c0_150 = arith.constant 0 : index
    %c7 = arith.constant 7 : index
    %c0_151 = arith.constant 0 : index
    %84 = vector.load %arg1[%c0_149, %c0_150, %c7, %c0_151] : memref<1x4x16x16xf32, #tpu.memory_space<vmem>>, vector<1x1x1x8xf32>
    %85 = vector.shape_cast %84 : vector<1x1x1x8xf32> to vector<1x8xf32>
    %c0_152 = arith.constant 0 : index
    %c56 = arith.constant 56 : index
    %86 = vector.load %arg5[%c0_152, %c56] : memref<4x256xf32, #tpu.memory_space<vmem>>, vector<1x8xf32>
    tpu.vector_store %arg5[%c0_152, %c56], %85 {strides = array<i32>} : memref<4x256xf32, #tpu.memory_space<vmem>>, vector<1x8xf32>,
    %c0_153 = arith.constant 0 : index
    %c0_154 = arith.constant 0 : index
    %c7_155 = arith.constant 7 : index
    %c8_156 = arith.constant 8 : index
    %87 = vector.load %arg1[%c0_153, %c0_154, %c7_155, %c8_156] : memref<1x4x16x16xf32, #tpu.memory_space<vmem>>, vector<1x1x1x8xf32>
    %88 = vector.shape_cast %87 : vector<1x1x1x8xf32> to vector<1x8xf32>
    %c1_157 = arith.constant 1 : index
    %c56_158 = arith.constant 56 : index
    %89 = vector.load %arg5[%c1_157, %c56_158] : memref<4x256xf32, #tpu.memory_space<vmem>>, vector<1x8xf32>
    tpu.vector_store %arg5[%c1_157, %c56_158], %88 {strides = array<i32>} : memref<4x256xf32, #tpu.memory_space<vmem>>, vector<1x8xf32>,
    %c0_159 = arith.constant 0 : index
    %c0_160 = arith.constant 0 : index
    %c15 = arith.constant 15 : index
    %c0_161 = arith.constant 0 : index
    %90 = vector.load %arg1[%c0_159, %c0_160, %c15, %c0_161] : memref<1x4x16x16xf32, #tpu.memory_space<vmem>>, vector<1x1x1x8xf32>
    %91 = vector.shape_cast %90 : vector<1x1x1x8xf32> to vector<1x8xf32>
    %c2_162 = arith.constant 2 : index
    %c56_163 = arith.constant 56 : index
    %92 = vector.load %arg5[%c2_162, %c56_163] : memref<4x256xf32, #tpu.memory_space<vmem>>, vector<1x8xf32>
    tpu.vector_store %arg5[%c2_162, %c56_163], %91 {strides = array<i32>} : memref<4x256xf32, #tpu.memory_space<vmem>>, vector<1x8xf32>,
    %c0_164 = arith.constant 0 : index
    %c0_165 = arith.constant 0 : index
    %c15_166 = arith.constant 15 : index
    %c8_167 = arith.constant 8 : index
    %93 = vector.load %arg1[%c0_164, %c0_165, %c15_166, %c8_167] : memref<1x4x16x16xf32, #tpu.memory_space<vmem>>, vector<1x1x1x8xf32>
    %94 = vector.shape_cast %93 : vector<1x1x1x8xf32> to vector<1x8xf32>
    %c3_168 = arith.constant 3 : index
    %c56_169 = arith.constant 56 : index
    %95 = vector.load %arg5[%c3_168, %c56_169] : memref<4x256xf32, #tpu.memory_space<vmem>>, vector<1x8xf32>
    tpu.vector_store %arg5[%c3_168, %c56_169], %94 {strides = array<i32>} : memref<4x256xf32, #tpu.memory_space<vmem>>, vector<1x8xf32>,
    %c0_170 = arith.constant 0 : index
    %c1_171 = arith.constant 1 : index
    %c0_172 = arith.constant 0 : index
    %c0_173 = arith.constant 0 : index
    %96 = vector.load %arg1[%c0_170, %c1_171, %c0_172, %c0_173] : memref<1x4x16x16xf32, #tpu.memory_space<vmem>>, vector<1x1x1x8xf32>
    %97 = vector.shape_cast %96 : vector<1x1x1x8xf32> to vector<1x8xf32>
    %c0_174 = arith.constant 0 : index
    %c64 = arith.constant 64 : index
    %98 = vector.load %arg5[%c0_174, %c64] : memref<4x256xf32, #tpu.memory_space<vmem>>, vector<1x8xf32>
    tpu.vector_store %arg5[%c0_174, %c64], %97 {strides = array<i32>} : memref<4x256xf32, #tpu.memory_space<vmem>>, vector<1x8xf32>,
    %c0_175 = arith.constant 0 : index
    %c1_176 = arith.constant 1 : index
    %c0_177 = arith.constant 0 : index
    %c8_178 = arith.constant 8 : index
    %99 = vector.load %arg1[%c0_175, %c1_176, %c0_177, %c8_178] : memref<1x4x16x16xf32, #tpu.memory_space<vmem>>, vector<1x1x1x8xf32>
    %100 = vector.shape_cast %99 : vector<1x1x1x8xf32> to vector<1x8xf32>
    %c1_179 = arith.constant 1 : index
    %c64_180 = arith.constant 64 : index
    %101 = vector.load %arg5[%c1_179, %c64_180] : memref<4x256xf32, #tpu.memory_space<vmem>>, vector<1x8xf32>
    tpu.vector_store %arg5[%c1_179, %c64_180], %100 {strides = array<i32>} : memref<4x256xf32, #tpu.memory_space<vmem>>, vector<1x8xf32>,
    %c0_181 = arith.constant 0 : index
    %c1_182 = arith.constant 1 : index
    %c8_183 = arith.constant 8 : index
    %c0_184 = arith.constant 0 : index
    %102 = vector.load %arg1[%c0_181, %c1_182, %c8_183, %c0_184] : memref<1x4x16x16xf32, #tpu.memory_space<vmem>>, vector<1x1x1x8xf32>
    %103 = vector.shape_cast %102 : vector<1x1x1x8xf32> to vector<1x8xf32>
    %c2_185 = arith.constant 2 : index
    %c64_186 = arith.constant 64 : index
    %104 = vector.load %arg5[%c2_185, %c64_186] : memref<4x256xf32, #tpu.memory_space<vmem>>, vector<1x8xf32>
    tpu.vector_store %arg5[%c2_185, %c64_186], %103 {strides = array<i32>} : memref<4x256xf32, #tpu.memory_space<vmem>>, vector<1x8xf32>,
    %c0_187 = arith.constant 0 : index
    %c1_188 = arith.constant 1 : index
    %c8_189 = arith.constant 8 : index
    %c8_190 = arith.constant 8 : index
    %105 = vector.load %arg1[%c0_187, %c1_188, %c8_189, %c8_190] : memref<1x4x16x16xf32, #tpu.memory_space<vmem>>, vector<1x1x1x8xf32>
    %106 = vector.shape_cast %105 : vector<1x1x1x8xf32> to vector<1x8xf32>
    %c3_191 = arith.constant 3 : index
    %c64_192 = arith.constant 64 : index
    %107 = vector.load %arg5[%c3_191, %c64_192] : memref<4x256xf32, #tpu.memory_space<vmem>>, vector<1x8xf32>
    tpu.vector_store %arg5[%c3_191, %c64_192], %106 {strides = array<i32>} : memref<4x256xf32, #tpu.memory_space<vmem>>, vector<1x8xf32>,
    %c0_193 = arith.constant 0 : index
    %c1_194 = arith.constant 1 : index
    %c1_195 = arith.constant 1 : index
    %c0_196 = arith.constant 0 : index
    %108 = vector.load %arg1[%c0_193, %c1_194, %c1_195, %c0_196] : memref<1x4x16x16xf32, #tpu.memory_space<vmem>>, vector<1x1x1x8xf32>
    %109 = vector.shape_cast %108 : vector<1x1x1x8xf32> to vector<1x8xf32>
    %c0_197 = arith.constant 0 : index
    %c72 = arith.constant 72 : index
    %110 = vector.load %arg5[%c0_197, %c72] : memref<4x256xf32, #tpu.memory_space<vmem>>, vector<1x8xf32>
    tpu.vector_store %arg5[%c0_197, %c72], %109 {strides = array<i32>} : memref<4x256xf32, #tpu.memory_space<vmem>>, vector<1x8xf32>,
    %c0_198 = arith.constant 0 : index
    %c1_199 = arith.constant 1 : index
    %c1_200 = arith.constant 1 : index
    %c8_201 = arith.constant 8 : index
    %111 = vector.load %arg1[%c0_198, %c1_199, %c1_200, %c8_201] : memref<1x4x16x16xf32, #tpu.memory_space<vmem>>, vector<1x1x1x8xf32>
    %112 = vector.shape_cast %111 : vector<1x1x1x8xf32> to vector<1x8xf32>
    %c1_202 = arith.constant 1 : index
    %c72_203 = arith.constant 72 : index
    %113 = vector.load %arg5[%c1_202, %c72_203] : memref<4x256xf32, #tpu.memory_space<vmem>>, vector<1x8xf32>
    tpu.vector_store %arg5[%c1_202, %c72_203], %112 {strides = array<i32>} : memref<4x256xf32, #tpu.memory_space<vmem>>, vector<1x8xf32>,
    %c0_204 = arith.constant 0 : index
    %c1_205 = arith.constant 1 : index
    %c9_206 = arith.constant 9 : index
    %c0_207 = arith.constant 0 : index
    %114 = vector.load %arg1[%c0_204, %c1_205, %c9_206, %c0_207] : memref<1x4x16x16xf32, #tpu.memory_space<vmem>>, vector<1x1x1x8xf32>
    %115 = vector.shape_cast %114 : vector<1x1x1x8xf32> to vector<1x8xf32>
    %c2_208 = arith.constant 2 : index
    %c72_209 = arith.constant 72 : index
    %116 = vector.load %arg5[%c2_208, %c72_209] : memref<4x256xf32, #tpu.memory_space<vmem>>, vector<1x8xf32>
    tpu.vector_store %arg5[%c2_208, %c72_209], %115 {strides = array<i32>} : memref<4x256xf32, #tpu.memory_space<vmem>>, vector<1x8xf32>,
    %c0_210 = arith.constant 0 : index
    %c1_211 = arith.constant 1 : index
    %c9_212 = arith.constant 9 : index
    %c8_213 = arith.constant 8 : index
    %117 = vector.load %arg1[%c0_210, %c1_211, %c9_212, %c8_213] : memref<1x4x16x16xf32, #tpu.memory_space<vmem>>, vector<1x1x1x8xf32>
    %118 = vector.shape_cast %117 : vector<1x1x1x8xf32> to vector<1x8xf32>
    %c3_214 = arith.constant 3 : index
    %c72_215 = arith.constant 72 : index
    %119 = vector.load %arg5[%c3_214, %c72_215] : memref<4x256xf32, #tpu.memory_space<vmem>>, vector<1x8xf32>
    tpu.vector_store %arg5[%c3_214, %c72_215], %118 {strides = array<i32>} : memref<4x256xf32, #tpu.memory_space<vmem>>, vector<1x8xf32>,
    %c0_216 = arith.constant 0 : index
    %c1_217 = arith.constant 1 : index
    %c2_218 = arith.constant 2 : index
    %c0_219 = arith.constant 0 : index
    %120 = vector.load %arg1[%c0_216, %c1_217, %c2_218, %c0_219] : memref<1x4x16x16xf32, #tpu.memory_space<vmem>>, vector<1x1x1x8xf32>
    %121 = vector.shape_cast %120 : vector<1x1x1x8xf32> to vector<1x8xf32>
    %c0_220 = arith.constant 0 : index
    %c80 = arith.constant 80 : index
    %122 = vector.load %arg5[%c0_220, %c80] : memref<4x256xf32, #tpu.memory_space<vmem>>, vector<1x8xf32>
    tpu.vector_store %arg5[%c0_220, %c80], %121 {strides = array<i32>} : memref<4x256xf32, #tpu.memory_space<vmem>>, vector<1x8xf32>,
    %c0_221 = arith.constant 0 : index
    %c1_222 = arith.constant 1 : index
    %c2_223 = arith.constant 2 : index
    %c8_224 = arith.constant 8 : index
    %123 = vector.load %arg1[%c0_221, %c1_222, %c2_223, %c8_224] : memref<1x4x16x16xf32, #tpu.memory_space<vmem>>, vector<1x1x1x8xf32>
    %124 = vector.shape_cast %123 : vector<1x1x1x8xf32> to vector<1x8xf32>
    %c1_225 = arith.constant 1 : index
    %c80_226 = arith.constant 80 : index
    %125 = vector.load %arg5[%c1_225, %c80_226] : memref<4x256xf32, #tpu.memory_space<vmem>>, vector<1x8xf32>
    tpu.vector_store %arg5[%c1_225, %c80_226], %124 {strides = array<i32>} : memref<4x256xf32, #tpu.memory_space<vmem>>, vector<1x8xf32>,
    %c0_227 = arith.constant 0 : index
    %c1_228 = arith.constant 1 : index
    %c10_229 = arith.constant 10 : index
    %c0_230 = arith.constant 0 : index
    %126 = vector.load %arg1[%c0_227, %c1_228, %c10_229, %c0_230] : memref<1x4x16x16xf32, #tpu.memory_space<vmem>>, vector<1x1x1x8xf32>
    %127 = vector.shape_cast %126 : vector<1x1x1x8xf32> to vector<1x8xf32>
    %c2_231 = arith.constant 2 : index
    %c80_232 = arith.constant 80 : index
    %128 = vector.load %arg5[%c2_231, %c80_232] : memref<4x256xf32, #tpu.memory_space<vmem>>, vector<1x8xf32>
    tpu.vector_store %arg5[%c2_231, %c80_232], %127 {strides = array<i32>} : memref<4x256xf32, #tpu.memory_space<vmem>>, vector<1x8xf32>,
    %c0_233 = arith.constant 0 : index
    %c1_234 = arith.constant 1 : index
    %c10_235 = arith.constant 10 : index
    %c8_236 = arith.constant 8 : index
    %129 = vector.load %arg1[%c0_233, %c1_234, %c10_235, %c8_236] : memref<1x4x16x16xf32, #tpu.memory_space<vmem>>, vector<1x1x1x8xf32>
    %130 = vector.shape_cast %129 : vector<1x1x1x8xf32> to vector<1x8xf32>
    %c3_237 = arith.constant 3 : index
    %c80_238 = arith.constant 80 : index
    %131 = vector.load %arg5[%c3_237, %c80_238] : memref<4x256xf32, #tpu.memory_space<vmem>>, vector<1x8xf32>
    tpu.vector_store %arg5[%c3_237, %c80_238], %130 {strides = array<i32>} : memref<4x256xf32, #tpu.memory_space<vmem>>, vector<1x8xf32>,
    %c0_239 = arith.constant 0 : index
    %c1_240 = arith.constant 1 : index
    %c3_241 = arith.constant 3 : index
    %c0_242 = arith.constant 0 : index
    %132 = vector.load %arg1[%c0_239, %c1_240, %c3_241, %c0_242] : memref<1x4x16x16xf32, #tpu.memory_space<vmem>>, vector<1x1x1x8xf32>
    %133 = vector.shape_cast %132 : vector<1x1x1x8xf32> to vector<1x8xf32>
    %c0_243 = arith.constant 0 : index
    %c88 = arith.constant 88 : index
    %134 = vector.load %arg5[%c0_243, %c88] : memref<4x256xf32, #tpu.memory_space<vmem>>, vector<1x8xf32>
    tpu.vector_store %arg5[%c0_243, %c88], %133 {strides = array<i32>} : memref<4x256xf32, #tpu.memory_space<vmem>>, vector<1x8xf32>,
    %c0_244 = arith.constant 0 : index
    %c1_245 = arith.constant 1 : index
    %c3_246 = arith.constant 3 : index
    %c8_247 = arith.constant 8 : index
    %135 = vector.load %arg1[%c0_244, %c1_245, %c3_246, %c8_247] : memref<1x4x16x16xf32, #tpu.memory_space<vmem>>, vector<1x1x1x8xf32>
    %136 = vector.shape_cast %135 : vector<1x1x1x8xf32> to vector<1x8xf32>
    %c1_248 = arith.constant 1 : index
    %c88_249 = arith.constant 88 : index
    %137 = vector.load %arg5[%c1_248, %c88_249] : memref<4x256xf32, #tpu.memory_space<vmem>>, vector<1x8xf32>
    tpu.vector_store %arg5[%c1_248, %c88_249], %136 {strides = array<i32>} : memref<4x256xf32, #tpu.memory_space<vmem>>, vector<1x8xf32>,
    %c0_250 = arith.constant 0 : index
    %c1_251 = arith.constant 1 : index
    %c11_252 = arith.constant 11 : index
    %c0_253 = arith.constant 0 : index
    %138 = vector.load %arg1[%c0_250, %c1_251, %c11_252, %c0_253] : memref<1x4x16x16xf32, #tpu.memory_space<vmem>>, vector<1x1x1x8xf32>
    %139 = vector.shape_cast %138 : vector<1x1x1x8xf32> to vector<1x8xf32>
    %c2_254 = arith.constant 2 : index
    %c88_255 = arith.constant 88 : index
    %140 = vector.load %arg5[%c2_254, %c88_255] : memref<4x256xf32, #tpu.memory_space<vmem>>, vector<1x8xf32>
    tpu.vector_store %arg5[%c2_254, %c88_255], %139 {strides = array<i32>} : memref<4x256xf32, #tpu.memory_space<vmem>>, vector<1x8xf32>,
    %c0_256 = arith.constant 0 : index
    %c1_257 = arith.constant 1 : index
    %c11_258 = arith.constant 11 : index
    %c8_259 = arith.constant 8 : index
    %141 = vector.load %arg1[%c0_256, %c1_257, %c11_258, %c8_259] : memref<1x4x16x16xf32, #tpu.memory_space<vmem>>, vector<1x1x1x8xf32>
    %142 = vector.shape_cast %141 : vector<1x1x1x8xf32> to vector<1x8xf32>
    %c3_260 = arith.constant 3 : index
    %c88_261 = arith.constant 88 : index
    %143 = vector.load %arg5[%c3_260, %c88_261] : memref<4x256xf32, #tpu.memory_space<vmem>>, vector<1x8xf32>
    tpu.vector_store %arg5[%c3_260, %c88_261], %142 {strides = array<i32>} : memref<4x256xf32, #tpu.memory_space<vmem>>, vector<1x8xf32>,
    %c0_262 = arith.constant 0 : index
    %c1_263 = arith.constant 1 : index
    %c4_264 = arith.constant 4 : index
    %c0_265 = arith.constant 0 : index
    %144 = vector.load %arg1[%c0_262, %c1_263, %c4_264, %c0_265] : memref<1x4x16x16xf32, #tpu.memory_space<vmem>>, vector<1x1x1x8xf32>
    %145 = vector.shape_cast %144 : vector<1x1x1x8xf32> to vector<1x8xf32>
    %c0_266 = arith.constant 0 : index
    %c96 = arith.constant 96 : index
    %146 = vector.load %arg5[%c0_266, %c96] : memref<4x256xf32, #tpu.memory_space<vmem>>, vector<1x8xf32>
    tpu.vector_store %arg5[%c0_266, %c96], %145 {strides = array<i32>} : memref<4x256xf32, #tpu.memory_space<vmem>>, vector<1x8xf32>,
    %c0_267 = arith.constant 0 : index
    %c1_268 = arith.constant 1 : index
    %c4_269 = arith.constant 4 : index
    %c8_270 = arith.constant 8 : index
    %147 = vector.load %arg1[%c0_267, %c1_268, %c4_269, %c8_270] : memref<1x4x16x16xf32, #tpu.memory_space<vmem>>, vector<1x1x1x8xf32>
    %148 = vector.shape_cast %147 : vector<1x1x1x8xf32> to vector<1x8xf32>
    %c1_271 = arith.constant 1 : index
    %c96_272 = arith.constant 96 : index
    %149 = vector.load %arg5[%c1_271, %c96_272] : memref<4x256xf32, #tpu.memory_space<vmem>>, vector<1x8xf32>
    tpu.vector_store %arg5[%c1_271, %c96_272], %148 {strides = array<i32>} : memref<4x256xf32, #tpu.memory_space<vmem>>, vector<1x8xf32>,
    %c0_273 = arith.constant 0 : index
    %c1_274 = arith.constant 1 : index
    %c12_275 = arith.constant 12 : index
    %c0_276 = arith.constant 0 : index
    %150 = vector.load %arg1[%c0_273, %c1_274, %c12_275, %c0_276] : memref<1x4x16x16xf32, #tpu.memory_space<vmem>>, vector<1x1x1x8xf32>
    %151 = vector.shape_cast %150 : vector<1x1x1x8xf32> to vector<1x8xf32>
    %c2_277 = arith.constant 2 : index
    %c96_278 = arith.constant 96 : index
    %152 = vector.load %arg5[%c2_277, %c96_278] : memref<4x256xf32, #tpu.memory_space<vmem>>, vector<1x8xf32>
    tpu.vector_store %arg5[%c2_277, %c96_278], %151 {strides = array<i32>} : memref<4x256xf32, #tpu.memory_space<vmem>>, vector<1x8xf32>,
    %c0_279 = arith.constant 0 : index
    %c1_280 = arith.constant 1 : index
    %c12_281 = arith.constant 12 : index
    %c8_282 = arith.constant 8 : index
    %153 = vector.load %arg1[%c0_279, %c1_280, %c12_281, %c8_282] : memref<1x4x16x16xf32, #tpu.memory_space<vmem>>, vector<1x1x1x8xf32>
    %154 = vector.shape_cast %153 : vector<1x1x1x8xf32> to vector<1x8xf32>
    %c3_283 = arith.constant 3 : index
    %c96_284 = arith.constant 96 : index
    %155 = vector.load %arg5[%c3_283, %c96_284] : memref<4x256xf32, #tpu.memory_space<vmem>>, vector<1x8xf32>
    tpu.vector_store %arg5[%c3_283, %c96_284], %154 {strides = array<i32>} : memref<4x256xf32, #tpu.memory_space<vmem>>, vector<1x8xf32>,
    %c0_285 = arith.constant 0 : index
    %c1_286 = arith.constant 1 : index
    %c5_287 = arith.constant 5 : index
    %c0_288 = arith.constant 0 : index
    %156 = vector.load %arg1[%c0_285, %c1_286, %c5_287, %c0_288] : memref<1x4x16x16xf32, #tpu.memory_space<vmem>>, vector<1x1x1x8xf32>
    %157 = vector.shape_cast %156 : vector<1x1x1x8xf32> to vector<1x8xf32>
    %c0_289 = arith.constant 0 : index
    %c104 = arith.constant 104 : index
    %158 = vector.load %arg5[%c0_289, %c104] : memref<4x256xf32, #tpu.memory_space<vmem>>, vector<1x8xf32>
    tpu.vector_store %arg5[%c0_289, %c104], %157 {strides = array<i32>} : memref<4x256xf32, #tpu.memory_space<vmem>>, vector<1x8xf32>,
    %c0_290 = arith.constant 0 : index
    %c1_291 = arith.constant 1 : index
    %c5_292 = arith.constant 5 : index
    %c8_293 = arith.constant 8 : index
    %159 = vector.load %arg1[%c0_290, %c1_291, %c5_292, %c8_293] : memref<1x4x16x16xf32, #tpu.memory_space<vmem>>, vector<1x1x1x8xf32>
    %160 = vector.shape_cast %159 : vector<1x1x1x8xf32> to vector<1x8xf32>
    %c1_294 = arith.constant 1 : index
    %c104_295 = arith.constant 104 : index
    %161 = vector.load %arg5[%c1_294, %c104_295] : memref<4x256xf32, #tpu.memory_space<vmem>>, vector<1x8xf32>
    tpu.vector_store %arg5[%c1_294, %c104_295], %160 {strides = array<i32>} : memref<4x256xf32, #tpu.memory_space<vmem>>, vector<1x8xf32>,
    %c0_296 = arith.constant 0 : index
    %c1_297 = arith.constant 1 : index
    %c13_298 = arith.constant 13 : index
    %c0_299 = arith.constant 0 : index
    %162 = vector.load %arg1[%c0_296, %c1_297, %c13_298, %c0_299] : memref<1x4x16x16xf32, #tpu.memory_space<vmem>>, vector<1x1x1x8xf32>
    %163 = vector.shape_cast %162 : vector<1x1x1x8xf32> to vector<1x8xf32>
    %c2_300 = arith.constant 2 : index
    %c104_301 = arith.constant 104 : index
    %164 = vector.load %arg5[%c2_300, %c104_301] : memref<4x256xf32, #tpu.memory_space<vmem>>, vector<1x8xf32>
    tpu.vector_store %arg5[%c2_300, %c104_301], %163 {strides = array<i32>} : memref<4x256xf32, #tpu.memory_space<vmem>>, vector<1x8xf32>,
    %c0_302 = arith.constant 0 : index
    %c1_303 = arith.constant 1 : index
    %c13_304 = arith.constant 13 : index
    %c8_305 = arith.constant 8 : index
    %165 = vector.load %arg1[%c0_302, %c1_303, %c13_304, %c8_305] : memref<1x4x16x16xf32, #tpu.memory_space<vmem>>, vector<1x1x1x8xf32>
    %166 = vector.shape_cast %165 : vector<1x1x1x8xf32> to vector<1x8xf32>
    %c3_306 = arith.constant 3 : index
    %c104_307 = arith.constant 104 : index
    %167 = vector.load %arg5[%c3_306, %c104_307] : memref<4x256xf32, #tpu.memory_space<vmem>>, vector<1x8xf32>
    tpu.vector_store %arg5[%c3_306, %c104_307], %166 {strides = array<i32>} : memref<4x256xf32, #tpu.memory_space<vmem>>, vector<1x8xf32>,
    %c0_308 = arith.constant 0 : index
    %c1_309 = arith.constant 1 : index
    %c6_310 = arith.constant 6 : index
    %c0_311 = arith.constant 0 : index
    %168 = vector.load %arg1[%c0_308, %c1_309, %c6_310, %c0_311] : memref<1x4x16x16xf32, #tpu.memory_space<vmem>>, vector<1x1x1x8xf32>
    %169 = vector.shape_cast %168 : vector<1x1x1x8xf32> to vector<1x8xf32>
    %c0_312 = arith.constant 0 : index
    %c112 = arith.constant 112 : index
    %170 = vector.load %arg5[%c0_312, %c112] : memref<4x256xf32, #tpu.memory_space<vmem>>, vector<1x8xf32>
    tpu.vector_store %arg5[%c0_312, %c112], %169 {strides = array<i32>} : memref<4x256xf32, #tpu.memory_space<vmem>>, vector<1x8xf32>,
    %c0_313 = arith.constant 0 : index
    %c1_314 = arith.constant 1 : index
    %c6_315 = arith.constant 6 : index
    %c8_316 = arith.constant 8 : index
    %171 = vector.load %arg1[%c0_313, %c1_314, %c6_315, %c8_316] : memref<1x4x16x16xf32, #tpu.memory_space<vmem>>, vector<1x1x1x8xf32>
    %172 = vector.shape_cast %171 : vector<1x1x1x8xf32> to vector<1x8xf32>
    %c1_317 = arith.constant 1 : index
    %c112_318 = arith.constant 112 : index
    %173 = vector.load %arg5[%c1_317, %c112_318] : memref<4x256xf32, #tpu.memory_space<vmem>>, vector<1x8xf32>
    tpu.vector_store %arg5[%c1_317, %c112_318], %172 {strides = array<i32>} : memref<4x256xf32, #tpu.memory_space<vmem>>, vector<1x8xf32>,
    %c0_319 = arith.constant 0 : index
    %c1_320 = arith.constant 1 : index
    %c14_321 = arith.constant 14 : index
    %c0_322 = arith.constant 0 : index
    %174 = vector.load %arg1[%c0_319, %c1_320, %c14_321, %c0_322] : memref<1x4x16x16xf32, #tpu.memory_space<vmem>>, vector<1x1x1x8xf32>
    %175 = vector.shape_cast %174 : vector<1x1x1x8xf32> to vector<1x8xf32>
    %c2_323 = arith.constant 2 : index
    %c112_324 = arith.constant 112 : index
    %176 = vector.load %arg5[%c2_323, %c112_324] : memref<4x256xf32, #tpu.memory_space<vmem>>, vector<1x8xf32>
    tpu.vector_store %arg5[%c2_323, %c112_324], %175 {strides = array<i32>} : memref<4x256xf32, #tpu.memory_space<vmem>>, vector<1x8xf32>,
    %c0_325 = arith.constant 0 : index
    %c1_326 = arith.constant 1 : index
    %c14_327 = arith.constant 14 : index
    %c8_328 = arith.constant 8 : index
    %177 = vector.load %arg1[%c0_325, %c1_326, %c14_327, %c8_328] : memref<1x4x16x16xf32, #tpu.memory_space<vmem>>, vector<1x1x1x8xf32>
    %178 = vector.shape_cast %177 : vector<1x1x1x8xf32> to vector<1x8xf32>
    %c3_329 = arith.constant 3 : index
    %c112_330 = arith.constant 112 : index
    %179 = vector.load %arg5[%c3_329, %c112_330] : memref<4x256xf32, #tpu.memory_space<vmem>>, vector<1x8xf32>
    tpu.vector_store %arg5[%c3_329, %c112_330], %178 {strides = array<i32>} : memref<4x256xf32, #tpu.memory_space<vmem>>, vector<1x8xf32>,
    %c0_331 = arith.constant 0 : index
    %c1_332 = arith.constant 1 : index
    %c7_333 = arith.constant 7 : index
    %c0_334 = arith.constant 0 : index
    %180 = vector.load %arg1[%c0_331, %c1_332, %c7_333, %c0_334] : memref<1x4x16x16xf32, #tpu.memory_space<vmem>>, vector<1x1x1x8xf32>
    %181 = vector.shape_cast %180 : vector<1x1x1x8xf32> to vector<1x8xf32>
    %c0_335 = arith.constant 0 : index
    %c120 = arith.constant 120 : index
    %182 = vector.load %arg5[%c0_335, %c120] : memref<4x256xf32, #tpu.memory_space<vmem>>, vector<1x8xf32>
    tpu.vector_store %arg5[%c0_335, %c120], %181 {strides = array<i32>} : memref<4x256xf32, #tpu.memory_space<vmem>>, vector<1x8xf32>,
    %c0_336 = arith.constant 0 : index
    %c1_337 = arith.constant 1 : index
    %c7_338 = arith.constant 7 : index
    %c8_339 = arith.constant 8 : index
    %183 = vector.load %arg1[%c0_336, %c1_337, %c7_338, %c8_339] : memref<1x4x16x16xf32, #tpu.memory_space<vmem>>, vector<1x1x1x8xf32>
    %184 = vector.shape_cast %183 : vector<1x1x1x8xf32> to vector<1x8xf32>
    %c1_340 = arith.constant 1 : index
    %c120_341 = arith.constant 120 : index
    %185 = vector.load %arg5[%c1_340, %c120_341] : memref<4x256xf32, #tpu.memory_space<vmem>>, vector<1x8xf32>
    tpu.vector_store %arg5[%c1_340, %c120_341], %184 {strides = array<i32>} : memref<4x256xf32, #tpu.memory_space<vmem>>, vector<1x8xf32>,
    %c0_342 = arith.constant 0 : index
    %c1_343 = arith.constant 1 : index
    %c15_344 = arith.constant 15 : index
    %c0_345 = arith.constant 0 : index
    %186 = vector.load %arg1[%c0_342, %c1_343, %c15_344, %c0_345] : memref<1x4x16x16xf32, #tpu.memory_space<vmem>>, vector<1x1x1x8xf32>
    %187 = vector.shape_cast %186 : vector<1x1x1x8xf32> to vector<1x8xf32>
    %c2_346 = arith.constant 2 : index
    %c120_347 = arith.constant 120 : index
    %188 = vector.load %arg5[%c2_346, %c120_347] : memref<4x256xf32, #tpu.memory_space<vmem>>, vector<1x8xf32>
    tpu.vector_store %arg5[%c2_346, %c120_347], %187 {strides = array<i32>} : memref<4x256xf32, #tpu.memory_space<vmem>>, vector<1x8xf32>,
    %c0_348 = arith.constant 0 : index
    %c1_349 = arith.constant 1 : index
    %c15_350 = arith.constant 15 : index
    %c8_351 = arith.constant 8 : index
    %189 = vector.load %arg1[%c0_348, %c1_349, %c15_350, %c8_351] : memref<1x4x16x16xf32, #tpu.memory_space<vmem>>, vector<1x1x1x8xf32>
    %190 = vector.shape_cast %189 : vector<1x1x1x8xf32> to vector<1x8xf32>
    %c3_352 = arith.constant 3 : index
    %c120_353 = arith.constant 120 : index
    %191 = vector.load %arg5[%c3_352, %c120_353] : memref<4x256xf32, #tpu.memory_space<vmem>>, vector<1x8xf32>
    tpu.vector_store %arg5[%c3_352, %c120_353], %190 {strides = array<i32>} : memref<4x256xf32, #tpu.memory_space<vmem>>, vector<1x8xf32>,
    %c0_354 = arith.constant 0 : index
    %c2_355 = arith.constant 2 : index
    %c0_356 = arith.constant 0 : index
    %c0_357 = arith.constant 0 : index
    %192 = vector.load %arg1[%c0_354, %c2_355, %c0_356, %c0_357] : memref<1x4x16x16xf32, #tpu.memory_space<vmem>>, vector<1x1x1x8xf32>
    %193 = vector.shape_cast %192 : vector<1x1x1x8xf32> to vector<1x8xf32>
    %c0_358 = arith.constant 0 : index
    %c128 = arith.constant 128 : index
    %194 = vector.load %arg5[%c0_358, %c128] : memref<4x256xf32, #tpu.memory_space<vmem>>, vector<1x8xf32>
    tpu.vector_store %arg5[%c0_358, %c128], %193 {strides = array<i32>} : memref<4x256xf32, #tpu.memory_space<vmem>>, vector<1x8xf32>,
    %c0_359 = arith.constant 0 : index
    %c2_360 = arith.constant 2 : index
    %c0_361 = arith.constant 0 : index
    %c8_362 = arith.constant 8 : index
    %195 = vector.load %arg1[%c0_359, %c2_360, %c0_361, %c8_362] : memref<1x4x16x16xf32, #tpu.memory_space<vmem>>, vector<1x1x1x8xf32>
    %196 = vector.shape_cast %195 : vector<1x1x1x8xf32> to vector<1x8xf32>
    %c1_363 = arith.constant 1 : index
    %c128_364 = arith.constant 128 : index
    %197 = vector.load %arg5[%c1_363, %c128_364] : memref<4x256xf32, #tpu.memory_space<vmem>>, vector<1x8xf32>
    tpu.vector_store %arg5[%c1_363, %c128_364], %196 {strides = array<i32>} : memref<4x256xf32, #tpu.memory_space<vmem>>, vector<1x8xf32>,
    %c0_365 = arith.constant 0 : index
    %c2_366 = arith.constant 2 : index
    %c8_367 = arith.constant 8 : index
    %c0_368 = arith.constant 0 : index
    %198 = vector.load %arg1[%c0_365, %c2_366, %c8_367, %c0_368] : memref<1x4x16x16xf32, #tpu.memory_space<vmem>>, vector<1x1x1x8xf32>
    %199 = vector.shape_cast %198 : vector<1x1x1x8xf32> to vector<1x8xf32>
    %c2_369 = arith.constant 2 : index
    %c128_370 = arith.constant 128 : index
    %200 = vector.load %arg5[%c2_369, %c128_370] : memref<4x256xf32, #tpu.memory_space<vmem>>, vector<1x8xf32>
    tpu.vector_store %arg5[%c2_369, %c128_370], %199 {strides = array<i32>} : memref<4x256xf32, #tpu.memory_space<vmem>>, vector<1x8xf32>,
    %c0_371 = arith.constant 0 : index
    %c2_372 = arith.constant 2 : index
    %c8_373 = arith.constant 8 : index
    %c8_374 = arith.constant 8 : index
    %201 = vector.load %arg1[%c0_371, %c2_372, %c8_373, %c8_374] : memref<1x4x16x16xf32, #tpu.memory_space<vmem>>, vector<1x1x1x8xf32>
    %202 = vector.shape_cast %201 : vector<1x1x1x8xf32> to vector<1x8xf32>
    %c3_375 = arith.constant 3 : index
    %c128_376 = arith.constant 128 : index
    %203 = vector.load %arg5[%c3_375, %c128_376] : memref<4x256xf32, #tpu.memory_space<vmem>>, vector<1x8xf32>
    tpu.vector_store %arg5[%c3_375, %c128_376], %202 {strides = array<i32>} : memref<4x256xf32, #tpu.memory_space<vmem>>, vector<1x8xf32>,
    %c0_377 = arith.constant 0 : index
    %c2_378 = arith.constant 2 : index
    %c1_379 = arith.constant 1 : index
    %c0_380 = arith.constant 0 : index
    %204 = vector.load %arg1[%c0_377, %c2_378, %c1_379, %c0_380] : memref<1x4x16x16xf32, #tpu.memory_space<vmem>>, vector<1x1x1x8xf32>
    %205 = vector.shape_cast %204 : vector<1x1x1x8xf32> to vector<1x8xf32>
    %c0_381 = arith.constant 0 : index
    %c136 = arith.constant 136 : index
    %206 = vector.load %arg5[%c0_381, %c136] : memref<4x256xf32, #tpu.memory_space<vmem>>, vector<1x8xf32>
    tpu.vector_store %arg5[%c0_381, %c136], %205 {strides = array<i32>} : memref<4x256xf32, #tpu.memory_space<vmem>>, vector<1x8xf32>,
    %c0_382 = arith.constant 0 : index
    %c2_383 = arith.constant 2 : index
    %c1_384 = arith.constant 1 : index
    %c8_385 = arith.constant 8 : index
    %207 = vector.load %arg1[%c0_382, %c2_383, %c1_384, %c8_385] : memref<1x4x16x16xf32, #tpu.memory_space<vmem>>, vector<1x1x1x8xf32>
    %208 = vector.shape_cast %207 : vector<1x1x1x8xf32> to vector<1x8xf32>
    %c1_386 = arith.constant 1 : index
    %c136_387 = arith.constant 136 : index
    %209 = vector.load %arg5[%c1_386, %c136_387] : memref<4x256xf32, #tpu.memory_space<vmem>>, vector<1x8xf32>
    tpu.vector_store %arg5[%c1_386, %c136_387], %208 {strides = array<i32>} : memref<4x256xf32, #tpu.memory_space<vmem>>, vector<1x8xf32>,
    %c0_388 = arith.constant 0 : index
    %c2_389 = arith.constant 2 : index
    %c9_390 = arith.constant 9 : index
    %c0_391 = arith.constant 0 : index
    %210 = vector.load %arg1[%c0_388, %c2_389, %c9_390, %c0_391] : memref<1x4x16x16xf32, #tpu.memory_space<vmem>>, vector<1x1x1x8xf32>
    %211 = vector.shape_cast %210 : vector<1x1x1x8xf32> to vector<1x8xf32>
    %c2_392 = arith.constant 2 : index
    %c136_393 = arith.constant 136 : index
    %212 = vector.load %arg5[%c2_392, %c136_393] : memref<4x256xf32, #tpu.memory_space<vmem>>, vector<1x8xf32>
    tpu.vector_store %arg5[%c2_392, %c136_393], %211 {strides = array<i32>} : memref<4x256xf32, #tpu.memory_space<vmem>>, vector<1x8xf32>,
    %c0_394 = arith.constant 0 : index
    %c2_395 = arith.constant 2 : index
    %c9_396 = arith.constant 9 : index
    %c8_397 = arith.constant 8 : index
    %213 = vector.load %arg1[%c0_394, %c2_395, %c9_396, %c8_397] : memref<1x4x16x16xf32, #tpu.memory_space<vmem>>, vector<1x1x1x8xf32>
    %214 = vector.shape_cast %213 : vector<1x1x1x8xf32> to vector<1x8xf32>
    %c3_398 = arith.constant 3 : index
    %c136_399 = arith.constant 136 : index
    %215 = vector.load %arg5[%c3_398, %c136_399] : memref<4x256xf32, #tpu.memory_space<vmem>>, vector<1x8xf32>
    tpu.vector_store %arg5[%c3_398, %c136_399], %214 {strides = array<i32>} : memref<4x256xf32, #tpu.memory_space<vmem>>, vector<1x8xf32>,
    %c0_400 = arith.constant 0 : index
    %c2_401 = arith.constant 2 : index
    %c2_402 = arith.constant 2 : index
    %c0_403 = arith.constant 0 : index
    %216 = vector.load %arg1[%c0_400, %c2_401, %c2_402, %c0_403] : memref<1x4x16x16xf32, #tpu.memory_space<vmem>>, vector<1x1x1x8xf32>
    %217 = vector.shape_cast %216 : vector<1x1x1x8xf32> to vector<1x8xf32>
    %c0_404 = arith.constant 0 : index
    %c144 = arith.constant 144 : index
    %218 = vector.load %arg5[%c0_404, %c144] : memref<4x256xf32, #tpu.memory_space<vmem>>, vector<1x8xf32>
    tpu.vector_store %arg5[%c0_404, %c144], %217 {strides = array<i32>} : memref<4x256xf32, #tpu.memory_space<vmem>>, vector<1x8xf32>,
    %c0_405 = arith.constant 0 : index
    %c2_406 = arith.constant 2 : index
    %c2_407 = arith.constant 2 : index
    %c8_408 = arith.constant 8 : index
    %219 = vector.load %arg1[%c0_405, %c2_406, %c2_407, %c8_408] : memref<1x4x16x16xf32, #tpu.memory_space<vmem>>, vector<1x1x1x8xf32>
    %220 = vector.shape_cast %219 : vector<1x1x1x8xf32> to vector<1x8xf32>
    %c1_409 = arith.constant 1 : index
    %c144_410 = arith.constant 144 : index
    %221 = vector.load %arg5[%c1_409, %c144_410] : memref<4x256xf32, #tpu.memory_space<vmem>>, vector<1x8xf32>
    tpu.vector_store %arg5[%c1_409, %c144_410], %220 {strides = array<i32>} : memref<4x256xf32, #tpu.memory_space<vmem>>, vector<1x8xf32>,
    %c0_411 = arith.constant 0 : index
    %c2_412 = arith.constant 2 : index
    %c10_413 = arith.constant 10 : index
    %c0_414 = arith.constant 0 : index
    %222 = vector.load %arg1[%c0_411, %c2_412, %c10_413, %c0_414] : memref<1x4x16x16xf32, #tpu.memory_space<vmem>>, vector<1x1x1x8xf32>
    %223 = vector.shape_cast %222 : vector<1x1x1x8xf32> to vector<1x8xf32>
    %c2_415 = arith.constant 2 : index
    %c144_416 = arith.constant 144 : index
    %224 = vector.load %arg5[%c2_415, %c144_416] : memref<4x256xf32, #tpu.memory_space<vmem>>, vector<1x8xf32>
    tpu.vector_store %arg5[%c2_415, %c144_416], %223 {strides = array<i32>} : memref<4x256xf32, #tpu.memory_space<vmem>>, vector<1x8xf32>,
    %c0_417 = arith.constant 0 : index
    %c2_418 = arith.constant 2 : index
    %c10_419 = arith.constant 10 : index
    %c8_420 = arith.constant 8 : index
    %225 = vector.load %arg1[%c0_417, %c2_418, %c10_419, %c8_420] : memref<1x4x16x16xf32, #tpu.memory_space<vmem>>, vector<1x1x1x8xf32>
    %226 = vector.shape_cast %225 : vector<1x1x1x8xf32> to vector<1x8xf32>
    %c3_421 = arith.constant 3 : index
    %c144_422 = arith.constant 144 : index
    %227 = vector.load %arg5[%c3_421, %c144_422] : memref<4x256xf32, #tpu.memory_space<vmem>>, vector<1x8xf32>
    tpu.vector_store %arg5[%c3_421, %c144_422], %226 {strides = array<i32>} : memref<4x256xf32, #tpu.memory_space<vmem>>, vector<1x8xf32>,
    %c0_423 = arith.constant 0 : index
    %c2_424 = arith.constant 2 : index
    %c3_425 = arith.constant 3 : index
    %c0_426 = arith.constant 0 : index
    %228 = vector.load %arg1[%c0_423, %c2_424, %c3_425, %c0_426] : memref<1x4x16x16xf32, #tpu.memory_space<vmem>>, vector<1x1x1x8xf32>
    %229 = vector.shape_cast %228 : vector<1x1x1x8xf32> to vector<1x8xf32>
    %c0_427 = arith.constant 0 : index
    %c152 = arith.constant 152 : index
    %230 = vector.load %arg5[%c0_427, %c152] : memref<4x256xf32, #tpu.memory_space<vmem>>, vector<1x8xf32>
    tpu.vector_store %arg5[%c0_427, %c152], %229 {strides = array<i32>} : memref<4x256xf32, #tpu.memory_space<vmem>>, vector<1x8xf32>,
    %c0_428 = arith.constant 0 : index
    %c2_429 = arith.constant 2 : index
    %c3_430 = arith.constant 3 : index
    %c8_431 = arith.constant 8 : index
    %231 = vector.load %arg1[%c0_428, %c2_429, %c3_430, %c8_431] : memref<1x4x16x16xf32, #tpu.memory_space<vmem>>, vector<1x1x1x8xf32>
    %232 = vector.shape_cast %231 : vector<1x1x1x8xf32> to vector<1x8xf32>
    %c1_432 = arith.constant 1 : index
    %c152_433 = arith.constant 152 : index
    %233 = vector.load %arg5[%c1_432, %c152_433] : memref<4x256xf32, #tpu.memory_space<vmem>>, vector<1x8xf32>
    tpu.vector_store %arg5[%c1_432, %c152_433], %232 {strides = array<i32>} : memref<4x256xf32, #tpu.memory_space<vmem>>, vector<1x8xf32>,
    %c0_434 = arith.constant 0 : index
    %c2_435 = arith.constant 2 : index
    %c11_436 = arith.constant 11 : index
    %c0_437 = arith.constant 0 : index
    %234 = vector.load %arg1[%c0_434, %c2_435, %c11_436, %c0_437] : memref<1x4x16x16xf32, #tpu.memory_space<vmem>>, vector<1x1x1x8xf32>
    %235 = vector.shape_cast %234 : vector<1x1x1x8xf32> to vector<1x8xf32>
    %c2_438 = arith.constant 2 : index
    %c152_439 = arith.constant 152 : index
    %236 = vector.load %arg5[%c2_438, %c152_439] : memref<4x256xf32, #tpu.memory_space<vmem>>, vector<1x8xf32>
    tpu.vector_store %arg5[%c2_438, %c152_439], %235 {strides = array<i32>} : memref<4x256xf32, #tpu.memory_space<vmem>>, vector<1x8xf32>,
    %c0_440 = arith.constant 0 : index
    %c2_441 = arith.constant 2 : index
    %c11_442 = arith.constant 11 : index
    %c8_443 = arith.constant 8 : index
    %237 = vector.load %arg1[%c0_440, %c2_441, %c11_442, %c8_443] : memref<1x4x16x16xf32, #tpu.memory_space<vmem>>, vector<1x1x1x8xf32>
    %238 = vector.shape_cast %237 : vector<1x1x1x8xf32> to vector<1x8xf32>
    %c3_444 = arith.constant 3 : index
    %c152_445 = arith.constant 152 : index
    %239 = vector.load %arg5[%c3_444, %c152_445] : memref<4x256xf32, #tpu.memory_space<vmem>>, vector<1x8xf32>
    tpu.vector_store %arg5[%c3_444, %c152_445], %238 {strides = array<i32>} : memref<4x256xf32, #tpu.memory_space<vmem>>, vector<1x8xf32>,
    %c0_446 = arith.constant 0 : index
    %c2_447 = arith.constant 2 : index
    %c4_448 = arith.constant 4 : index
    %c0_449 = arith.constant 0 : index
    %240 = vector.load %arg1[%c0_446, %c2_447, %c4_448, %c0_449] : memref<1x4x16x16xf32, #tpu.memory_space<vmem>>, vector<1x1x1x8xf32>
    %241 = vector.shape_cast %240 : vector<1x1x1x8xf32> to vector<1x8xf32>
    %c0_450 = arith.constant 0 : index
    %c160 = arith.constant 160 : index
    %242 = vector.load %arg5[%c0_450, %c160] : memref<4x256xf32, #tpu.memory_space<vmem>>, vector<1x8xf32>
    tpu.vector_store %arg5[%c0_450, %c160], %241 {strides = array<i32>} : memref<4x256xf32, #tpu.memory_space<vmem>>, vector<1x8xf32>,
    %c0_451 = arith.constant 0 : index
    %c2_452 = arith.constant 2 : index
    %c4_453 = arith.constant 4 : index
    %c8_454 = arith.constant 8 : index
    %243 = vector.load %arg1[%c0_451, %c2_452, %c4_453, %c8_454] : memref<1x4x16x16xf32, #tpu.memory_space<vmem>>, vector<1x1x1x8xf32>
    %244 = vector.shape_cast %243 : vector<1x1x1x8xf32> to vector<1x8xf32>
    %c1_455 = arith.constant 1 : index
    %c160_456 = arith.constant 160 : index
    %245 = vector.load %arg5[%c1_455, %c160_456] : memref<4x256xf32, #tpu.memory_space<vmem>>, vector<1x8xf32>
    tpu.vector_store %arg5[%c1_455, %c160_456], %244 {strides = array<i32>} : memref<4x256xf32, #tpu.memory_space<vmem>>, vector<1x8xf32>,
    %c0_457 = arith.constant 0 : index
    %c2_458 = arith.constant 2 : index
    %c12_459 = arith.constant 12 : index
    %c0_460 = arith.constant 0 : index
    %246 = vector.load %arg1[%c0_457, %c2_458, %c12_459, %c0_460] : memref<1x4x16x16xf32, #tpu.memory_space<vmem>>, vector<1x1x1x8xf32>
    %247 = vector.shape_cast %246 : vector<1x1x1x8xf32> to vector<1x8xf32>
    %c2_461 = arith.constant 2 : index
    %c160_462 = arith.constant 160 : index
    %248 = vector.load %arg5[%c2_461, %c160_462] : memref<4x256xf32, #tpu.memory_space<vmem>>, vector<1x8xf32>
    tpu.vector_store %arg5[%c2_461, %c160_462], %247 {strides = array<i32>} : memref<4x256xf32, #tpu.memory_space<vmem>>, vector<1x8xf32>,
    %c0_463 = arith.constant 0 : index
    %c2_464 = arith.constant 2 : index
    %c12_465 = arith.constant 12 : index
    %c8_466 = arith.constant 8 : index
    %249 = vector.load %arg1[%c0_463, %c2_464, %c12_465, %c8_466] : memref<1x4x16x16xf32, #tpu.memory_space<vmem>>, vector<1x1x1x8xf32>
    %250 = vector.shape_cast %249 : vector<1x1x1x8xf32> to vector<1x8xf32>
    %c3_467 = arith.constant 3 : index
    %c160_468 = arith.constant 160 : index
    %251 = vector.load %arg5[%c3_467, %c160_468] : memref<4x256xf32, #tpu.memory_space<vmem>>, vector<1x8xf32>
    tpu.vector_store %arg5[%c3_467, %c160_468], %250 {strides = array<i32>} : memref<4x256xf32, #tpu.memory_space<vmem>>, vector<1x8xf32>,
    %c0_469 = arith.constant 0 : index
    %c2_470 = arith.constant 2 : index
    %c5_471 = arith.constant 5 : index
    %c0_472 = arith.constant 0 : index
    %252 = vector.load %arg1[%c0_469, %c2_470, %c5_471, %c0_472] : memref<1x4x16x16xf32, #tpu.memory_space<vmem>>, vector<1x1x1x8xf32>
    %253 = vector.shape_cast %252 : vector<1x1x1x8xf32> to vector<1x8xf32>
    %c0_473 = arith.constant 0 : index
    %c168 = arith.constant 168 : index
    %254 = vector.load %arg5[%c0_473, %c168] : memref<4x256xf32, #tpu.memory_space<vmem>>, vector<1x8xf32>
    tpu.vector_store %arg5[%c0_473, %c168], %253 {strides = array<i32>} : memref<4x256xf32, #tpu.memory_space<vmem>>, vector<1x8xf32>,
    %c0_474 = arith.constant 0 : index
    %c2_475 = arith.constant 2 : index
    %c5_476 = arith.constant 5 : index
    %c8_477 = arith.constant 8 : index
    %255 = vector.load %arg1[%c0_474, %c2_475, %c5_476, %c8_477] : memref<1x4x16x16xf32, #tpu.memory_space<vmem>>, vector<1x1x1x8xf32>
    %256 = vector.shape_cast %255 : vector<1x1x1x8xf32> to vector<1x8xf32>
    %c1_478 = arith.constant 1 : index
    %c168_479 = arith.constant 168 : index
    %257 = vector.load %arg5[%c1_478, %c168_479] : memref<4x256xf32, #tpu.memory_space<vmem>>, vector<1x8xf32>
    tpu.vector_store %arg5[%c1_478, %c168_479], %256 {strides = array<i32>} : memref<4x256xf32, #tpu.memory_space<vmem>>, vector<1x8xf32>,
    %c0_480 = arith.constant 0 : index
    %c2_481 = arith.constant 2 : index
    %c13_482 = arith.constant 13 : index
    %c0_483 = arith.constant 0 : index
    %258 = vector.load %arg1[%c0_480, %c2_481, %c13_482, %c0_483] : memref<1x4x16x16xf32, #tpu.memory_space<vmem>>, vector<1x1x1x8xf32>
    %259 = vector.shape_cast %258 : vector<1x1x1x8xf32> to vector<1x8xf32>
    %c2_484 = arith.constant 2 : index
    %c168_485 = arith.constant 168 : index
    %260 = vector.load %arg5[%c2_484, %c168_485] : memref<4x256xf32, #tpu.memory_space<vmem>>, vector<1x8xf32>
    tpu.vector_store %arg5[%c2_484, %c168_485], %259 {strides = array<i32>} : memref<4x256xf32, #tpu.memory_space<vmem>>, vector<1x8xf32>,
    %c0_486 = arith.constant 0 : index
    %c2_487 = arith.constant 2 : index
    %c13_488 = arith.constant 13 : index
    %c8_489 = arith.constant 8 : index
    %261 = vector.load %arg1[%c0_486, %c2_487, %c13_488, %c8_489] : memref<1x4x16x16xf32, #tpu.memory_space<vmem>>, vector<1x1x1x8xf32>
    %262 = vector.shape_cast %261 : vector<1x1x1x8xf32> to vector<1x8xf32>
    %c3_490 = arith.constant 3 : index
    %c168_491 = arith.constant 168 : index
    %263 = vector.load %arg5[%c3_490, %c168_491] : memref<4x256xf32, #tpu.memory_space<vmem>>, vector<1x8xf32>
    tpu.vector_store %arg5[%c3_490, %c168_491], %262 {strides = array<i32>} : memref<4x256xf32, #tpu.memory_space<vmem>>, vector<1x8xf32>,
    %c0_492 = arith.constant 0 : index
    %c2_493 = arith.constant 2 : index
    %c6_494 = arith.constant 6 : index
    %c0_495 = arith.constant 0 : index
    %264 = vector.load %arg1[%c0_492, %c2_493, %c6_494, %c0_495] : memref<1x4x16x16xf32, #tpu.memory_space<vmem>>, vector<1x1x1x8xf32>
    %265 = vector.shape_cast %264 : vector<1x1x1x8xf32> to vector<1x8xf32>
    %c0_496 = arith.constant 0 : index
    %c176 = arith.constant 176 : index
    %266 = vector.load %arg5[%c0_496, %c176] : memref<4x256xf32, #tpu.memory_space<vmem>>, vector<1x8xf32>
    tpu.vector_store %arg5[%c0_496, %c176], %265 {strides = array<i32>} : memref<4x256xf32, #tpu.memory_space<vmem>>, vector<1x8xf32>,
    %c0_497 = arith.constant 0 : index
    %c2_498 = arith.constant 2 : index
    %c6_499 = arith.constant 6 : index
    %c8_500 = arith.constant 8 : index
    %267 = vector.load %arg1[%c0_497, %c2_498, %c6_499, %c8_500] : memref<1x4x16x16xf32, #tpu.memory_space<vmem>>, vector<1x1x1x8xf32>
    %268 = vector.shape_cast %267 : vector<1x1x1x8xf32> to vector<1x8xf32>
    %c1_501 = arith.constant 1 : index
    %c176_502 = arith.constant 176 : index
    %269 = vector.load %arg5[%c1_501, %c176_502] : memref<4x256xf32, #tpu.memory_space<vmem>>, vector<1x8xf32>
    tpu.vector_store %arg5[%c1_501, %c176_502], %268 {strides = array<i32>} : memref<4x256xf32, #tpu.memory_space<vmem>>, vector<1x8xf32>,
    %c0_503 = arith.constant 0 : index
    %c2_504 = arith.constant 2 : index
    %c14_505 = arith.constant 14 : index
    %c0_506 = arith.constant 0 : index
    %270 = vector.load %arg1[%c0_503, %c2_504, %c14_505, %c0_506] : memref<1x4x16x16xf32, #tpu.memory_space<vmem>>, vector<1x1x1x8xf32>
    %271 = vector.shape_cast %270 : vector<1x1x1x8xf32> to vector<1x8xf32>
    %c2_507 = arith.constant 2 : index
    %c176_508 = arith.constant 176 : index
    %272 = vector.load %arg5[%c2_507, %c176_508] : memref<4x256xf32, #tpu.memory_space<vmem>>, vector<1x8xf32>
    tpu.vector_store %arg5[%c2_507, %c176_508], %271 {strides = array<i32>} : memref<4x256xf32, #tpu.memory_space<vmem>>, vector<1x8xf32>,
    %c0_509 = arith.constant 0 : index
    %c2_510 = arith.constant 2 : index
    %c14_511 = arith.constant 14 : index
    %c8_512 = arith.constant 8 : index
    %273 = vector.load %arg1[%c0_509, %c2_510, %c14_511, %c8_512] : memref<1x4x16x16xf32, #tpu.memory_space<vmem>>, vector<1x1x1x8xf32>
    %274 = vector.shape_cast %273 : vector<1x1x1x8xf32> to vector<1x8xf32>
    %c3_513 = arith.constant 3 : index
    %c176_514 = arith.constant 176 : index
    %275 = vector.load %arg5[%c3_513, %c176_514] : memref<4x256xf32, #tpu.memory_space<vmem>>, vector<1x8xf32>
    tpu.vector_store %arg5[%c3_513, %c176_514], %274 {strides = array<i32>} : memref<4x256xf32, #tpu.memory_space<vmem>>, vector<1x8xf32>,
    %c0_515 = arith.constant 0 : index
    %c2_516 = arith.constant 2 : index
    %c7_517 = arith.constant 7 : index
    %c0_518 = arith.constant 0 : index
    %276 = vector.load %arg1[%c0_515, %c2_516, %c7_517, %c0_518] : memref<1x4x16x16xf32, #tpu.memory_space<vmem>>, vector<1x1x1x8xf32>
    %277 = vector.shape_cast %276 : vector<1x1x1x8xf32> to vector<1x8xf32>
    %c0_519 = arith.constant 0 : index
    %c184 = arith.constant 184 : index
    %278 = vector.load %arg5[%c0_519, %c184] : memref<4x256xf32, #tpu.memory_space<vmem>>, vector<1x8xf32>
    tpu.vector_store %arg5[%c0_519, %c184], %277 {strides = array<i32>} : memref<4x256xf32, #tpu.memory_space<vmem>>, vector<1x8xf32>,
    %c0_520 = arith.constant 0 : index
    %c2_521 = arith.constant 2 : index
    %c7_522 = arith.constant 7 : index
    %c8_523 = arith.constant 8 : index
    %279 = vector.load %arg1[%c0_520, %c2_521, %c7_522, %c8_523] : memref<1x4x16x16xf32, #tpu.memory_space<vmem>>, vector<1x1x1x8xf32>
    %280 = vector.shape_cast %279 : vector<1x1x1x8xf32> to vector<1x8xf32>
    %c1_524 = arith.constant 1 : index
    %c184_525 = arith.constant 184 : index
    %281 = vector.load %arg5[%c1_524, %c184_525] : memref<4x256xf32, #tpu.memory_space<vmem>>, vector<1x8xf32>
    tpu.vector_store %arg5[%c1_524, %c184_525], %280 {strides = array<i32>} : memref<4x256xf32, #tpu.memory_space<vmem>>, vector<1x8xf32>,
    %c0_526 = arith.constant 0 : index
    %c2_527 = arith.constant 2 : index
    %c15_528 = arith.constant 15 : index
    %c0_529 = arith.constant 0 : index
    %282 = vector.load %arg1[%c0_526, %c2_527, %c15_528, %c0_529] : memref<1x4x16x16xf32, #tpu.memory_space<vmem>>, vector<1x1x1x8xf32>
    %283 = vector.shape_cast %282 : vector<1x1x1x8xf32> to vector<1x8xf32>
    %c2_530 = arith.constant 2 : index
    %c184_531 = arith.constant 184 : index
    %284 = vector.load %arg5[%c2_530, %c184_531] : memref<4x256xf32, #tpu.memory_space<vmem>>, vector<1x8xf32>
    tpu.vector_store %arg5[%c2_530, %c184_531], %283 {strides = array<i32>} : memref<4x256xf32, #tpu.memory_space<vmem>>, vector<1x8xf32>,
    %c0_532 = arith.constant 0 : index
    %c2_533 = arith.constant 2 : index
    %c15_534 = arith.constant 15 : index
    %c8_535 = arith.constant 8 : index
    %285 = vector.load %arg1[%c0_532, %c2_533, %c15_534, %c8_535] : memref<1x4x16x16xf32, #tpu.memory_space<vmem>>, vector<1x1x1x8xf32>
    %286 = vector.shape_cast %285 : vector<1x1x1x8xf32> to vector<1x8xf32>
    %c3_536 = arith.constant 3 : index
    %c184_537 = arith.constant 184 : index
    %287 = vector.load %arg5[%c3_536, %c184_537] : memref<4x256xf32, #tpu.memory_space<vmem>>, vector<1x8xf32>
    tpu.vector_store %arg5[%c3_536, %c184_537], %286 {strides = array<i32>} : memref<4x256xf32, #tpu.memory_space<vmem>>, vector<1x8xf32>,
    %c0_538 = arith.constant 0 : index
    %c3_539 = arith.constant 3 : index
    %c0_540 = arith.constant 0 : index
    %c0_541 = arith.constant 0 : index
    %288 = vector.load %arg1[%c0_538, %c3_539, %c0_540, %c0_541] : memref<1x4x16x16xf32, #tpu.memory_space<vmem>>, vector<1x1x1x8xf32>
    %289 = vector.shape_cast %288 : vector<1x1x1x8xf32> to vector<1x8xf32>
    %c0_542 = arith.constant 0 : index
    %c192 = arith.constant 192 : index
    %290 = vector.load %arg5[%c0_542, %c192] : memref<4x256xf32, #tpu.memory_space<vmem>>, vector<1x8xf32>
    tpu.vector_store %arg5[%c0_542, %c192], %289 {strides = array<i32>} : memref<4x256xf32, #tpu.memory_space<vmem>>, vector<1x8xf32>,
    %c0_543 = arith.constant 0 : index
    %c3_544 = arith.constant 3 : index
    %c0_545 = arith.constant 0 : index
    %c8_546 = arith.constant 8 : index
    %291 = vector.load %arg1[%c0_543, %c3_544, %c0_545, %c8_546] : memref<1x4x16x16xf32, #tpu.memory_space<vmem>>, vector<1x1x1x8xf32>
    %292 = vector.shape_cast %291 : vector<1x1x1x8xf32> to vector<1x8xf32>
    %c1_547 = arith.constant 1 : index
    %c192_548 = arith.constant 192 : index
    %293 = vector.load %arg5[%c1_547, %c192_548] : memref<4x256xf32, #tpu.memory_space<vmem>>, vector<1x8xf32>
    tpu.vector_store %arg5[%c1_547, %c192_548], %292 {strides = array<i32>} : memref<4x256xf32, #tpu.memory_space<vmem>>, vector<1x8xf32>,
    %c0_549 = arith.constant 0 : index
    %c3_550 = arith.constant 3 : index
    %c8_551 = arith.constant 8 : index
    %c0_552 = arith.constant 0 : index
    %294 = vector.load %arg1[%c0_549, %c3_550, %c8_551, %c0_552] : memref<1x4x16x16xf32, #tpu.memory_space<vmem>>, vector<1x1x1x8xf32>
    %295 = vector.shape_cast %294 : vector<1x1x1x8xf32> to vector<1x8xf32>
    %c2_553 = arith.constant 2 : index
    %c192_554 = arith.constant 192 : index
    %296 = vector.load %arg5[%c2_553, %c192_554] : memref<4x256xf32, #tpu.memory_space<vmem>>, vector<1x8xf32>
    tpu.vector_store %arg5[%c2_553, %c192_554], %295 {strides = array<i32>} : memref<4x256xf32, #tpu.memory_space<vmem>>, vector<1x8xf32>,
    %c0_555 = arith.constant 0 : index
    %c3_556 = arith.constant 3 : index
    %c8_557 = arith.constant 8 : index
    %c8_558 = arith.constant 8 : index
    %297 = vector.load %arg1[%c0_555, %c3_556, %c8_557, %c8_558] : memref<1x4x16x16xf32, #tpu.memory_space<vmem>>, vector<1x1x1x8xf32>
    %298 = vector.shape_cast %297 : vector<1x1x1x8xf32> to vector<1x8xf32>
    %c3_559 = arith.constant 3 : index
    %c192_560 = arith.constant 192 : index
    %299 = vector.load %arg5[%c3_559, %c192_560] : memref<4x256xf32, #tpu.memory_space<vmem>>, vector<1x8xf32>
    tpu.vector_store %arg5[%c3_559, %c192_560], %298 {strides = array<i32>} : memref<4x256xf32, #tpu.memory_space<vmem>>, vector<1x8xf32>,
    %c0_561 = arith.constant 0 : index
    %c3_562 = arith.constant 3 : index
    %c1_563 = arith.constant 1 : index
    %c0_564 = arith.constant 0 : index
    %300 = vector.load %arg1[%c0_561, %c3_562, %c1_563, %c0_564] : memref<1x4x16x16xf32, #tpu.memory_space<vmem>>, vector<1x1x1x8xf32>
    %301 = vector.shape_cast %300 : vector<1x1x1x8xf32> to vector<1x8xf32>
    %c0_565 = arith.constant 0 : index
    %c200 = arith.constant 200 : index
    %302 = vector.load %arg5[%c0_565, %c200] : memref<4x256xf32, #tpu.memory_space<vmem>>, vector<1x8xf32>
    tpu.vector_store %arg5[%c0_565, %c200], %301 {strides = array<i32>} : memref<4x256xf32, #tpu.memory_space<vmem>>, vector<1x8xf32>,
    %c0_566 = arith.constant 0 : index
    %c3_567 = arith.constant 3 : index
    %c1_568 = arith.constant 1 : index
    %c8_569 = arith.constant 8 : index
    %303 = vector.load %arg1[%c0_566, %c3_567, %c1_568, %c8_569] : memref<1x4x16x16xf32, #tpu.memory_space<vmem>>, vector<1x1x1x8xf32>
    %304 = vector.shape_cast %303 : vector<1x1x1x8xf32> to vector<1x8xf32>
    %c1_570 = arith.constant 1 : index
    %c200_571 = arith.constant 200 : index
    %305 = vector.load %arg5[%c1_570, %c200_571] : memref<4x256xf32, #tpu.memory_space<vmem>>, vector<1x8xf32>
    tpu.vector_store %arg5[%c1_570, %c200_571], %304 {strides = array<i32>} : memref<4x256xf32, #tpu.memory_space<vmem>>, vector<1x8xf32>,
    %c0_572 = arith.constant 0 : index
    %c3_573 = arith.constant 3 : index
    %c9_574 = arith.constant 9 : index
    %c0_575 = arith.constant 0 : index
    %306 = vector.load %arg1[%c0_572, %c3_573, %c9_574, %c0_575] : memref<1x4x16x16xf32, #tpu.memory_space<vmem>>, vector<1x1x1x8xf32>
    %307 = vector.shape_cast %306 : vector<1x1x1x8xf32> to vector<1x8xf32>
    %c2_576 = arith.constant 2 : index
    %c200_577 = arith.constant 200 : index
    %308 = vector.load %arg5[%c2_576, %c200_577] : memref<4x256xf32, #tpu.memory_space<vmem>>, vector<1x8xf32>
    tpu.vector_store %arg5[%c2_576, %c200_577], %307 {strides = array<i32>} : memref<4x256xf32, #tpu.memory_space<vmem>>, vector<1x8xf32>,
    %c0_578 = arith.constant 0 : index
    %c3_579 = arith.constant 3 : index
    %c9_580 = arith.constant 9 : index
    %c8_581 = arith.constant 8 : index
    %309 = vector.load %arg1[%c0_578, %c3_579, %c9_580, %c8_581] : memref<1x4x16x16xf32, #tpu.memory_space<vmem>>, vector<1x1x1x8xf32>
    %310 = vector.shape_cast %309 : vector<1x1x1x8xf32> to vector<1x8xf32>
    %c3_582 = arith.constant 3 : index
    %c200_583 = arith.constant 200 : index
    %311 = vector.load %arg5[%c3_582, %c200_583] : memref<4x256xf32, #tpu.memory_space<vmem>>, vector<1x8xf32>
    tpu.vector_store %arg5[%c3_582, %c200_583], %310 {strides = array<i32>} : memref<4x256xf32, #tpu.memory_space<vmem>>, vector<1x8xf32>,
    %c0_584 = arith.constant 0 : index
    %c3_585 = arith.constant 3 : index
    %c2_586 = arith.constant 2 : index
    %c0_587 = arith.constant 0 : index
    %312 = vector.load %arg1[%c0_584, %c3_585, %c2_586, %c0_587] : memref<1x4x16x16xf32, #tpu.memory_space<vmem>>, vector<1x1x1x8xf32>
    %313 = vector.shape_cast %312 : vector<1x1x1x8xf32> to vector<1x8xf32>
    %c0_588 = arith.constant 0 : index
    %c208 = arith.constant 208 : index
    %314 = vector.load %arg5[%c0_588, %c208] : memref<4x256xf32, #tpu.memory_space<vmem>>, vector<1x8xf32>
    tpu.vector_store %arg5[%c0_588, %c208], %313 {strides = array<i32>} : memref<4x256xf32, #tpu.memory_space<vmem>>, vector<1x8xf32>,
    %c0_589 = arith.constant 0 : index
    %c3_590 = arith.constant 3 : index
    %c2_591 = arith.constant 2 : index
    %c8_592 = arith.constant 8 : index
    %315 = vector.load %arg1[%c0_589, %c3_590, %c2_591, %c8_592] : memref<1x4x16x16xf32, #tpu.memory_space<vmem>>, vector<1x1x1x8xf32>
    %316 = vector.shape_cast %315 : vector<1x1x1x8xf32> to vector<1x8xf32>
    %c1_593 = arith.constant 1 : index
    %c208_594 = arith.constant 208 : index
    %317 = vector.load %arg5[%c1_593, %c208_594] : memref<4x256xf32, #tpu.memory_space<vmem>>, vector<1x8xf32>
    tpu.vector_store %arg5[%c1_593, %c208_594], %316 {strides = array<i32>} : memref<4x256xf32, #tpu.memory_space<vmem>>, vector<1x8xf32>,
    %c0_595 = arith.constant 0 : index
    %c3_596 = arith.constant 3 : index
    %c10_597 = arith.constant 10 : index
    %c0_598 = arith.constant 0 : index
    %318 = vector.load %arg1[%c0_595, %c3_596, %c10_597, %c0_598] : memref<1x4x16x16xf32, #tpu.memory_space<vmem>>, vector<1x1x1x8xf32>
    %319 = vector.shape_cast %318 : vector<1x1x1x8xf32> to vector<1x8xf32>
    %c2_599 = arith.constant 2 : index
    %c208_600 = arith.constant 208 : index
    %320 = vector.load %arg5[%c2_599, %c208_600] : memref<4x256xf32, #tpu.memory_space<vmem>>, vector<1x8xf32>
    tpu.vector_store %arg5[%c2_599, %c208_600], %319 {strides = array<i32>} : memref<4x256xf32, #tpu.memory_space<vmem>>, vector<1x8xf32>,
    %c0_601 = arith.constant 0 : index
    %c3_602 = arith.constant 3 : index
    %c10_603 = arith.constant 10 : index
    %c8_604 = arith.constant 8 : index
    %321 = vector.load %arg1[%c0_601, %c3_602, %c10_603, %c8_604] : memref<1x4x16x16xf32, #tpu.memory_space<vmem>>, vector<1x1x1x8xf32>
    %322 = vector.shape_cast %321 : vector<1x1x1x8xf32> to vector<1x8xf32>
    %c3_605 = arith.constant 3 : index
    %c208_606 = arith.constant 208 : index
    %323 = vector.load %arg5[%c3_605, %c208_606] : memref<4x256xf32, #tpu.memory_space<vmem>>, vector<1x8xf32>
    tpu.vector_store %arg5[%c3_605, %c208_606], %322 {strides = array<i32>} : memref<4x256xf32, #tpu.memory_space<vmem>>, vector<1x8xf32>,
    %c0_607 = arith.constant 0 : index
    %c3_608 = arith.constant 3 : index
    %c3_609 = arith.constant 3 : index
    %c0_610 = arith.constant 0 : index
    %324 = vector.load %arg1[%c0_607, %c3_608, %c3_609, %c0_610] : memref<1x4x16x16xf32, #tpu.memory_space<vmem>>, vector<1x1x1x8xf32>
    %325 = vector.shape_cast %324 : vector<1x1x1x8xf32> to vector<1x8xf32>
    %c0_611 = arith.constant 0 : index
    %c216 = arith.constant 216 : index
    %326 = vector.load %arg5[%c0_611, %c216] : memref<4x256xf32, #tpu.memory_space<vmem>>, vector<1x8xf32>
    tpu.vector_store %arg5[%c0_611, %c216], %325 {strides = array<i32>} : memref<4x256xf32, #tpu.memory_space<vmem>>, vector<1x8xf32>,
    %c0_612 = arith.constant 0 : index
    %c3_613 = arith.constant 3 : index
    %c3_614 = arith.constant 3 : index
    %c8_615 = arith.constant 8 : index
    %327 = vector.load %arg1[%c0_612, %c3_613, %c3_614, %c8_615] : memref<1x4x16x16xf32, #tpu.memory_space<vmem>>, vector<1x1x1x8xf32>
    %328 = vector.shape_cast %327 : vector<1x1x1x8xf32> to vector<1x8xf32>
    %c1_616 = arith.constant 1 : index
    %c216_617 = arith.constant 216 : index
    %329 = vector.load %arg5[%c1_616, %c216_617] : memref<4x256xf32, #tpu.memory_space<vmem>>, vector<1x8xf32>
    tpu.vector_store %arg5[%c1_616, %c216_617], %328 {strides = array<i32>} : memref<4x256xf32, #tpu.memory_space<vmem>>, vector<1x8xf32>,
    %c0_618 = arith.constant 0 : index
    %c3_619 = arith.constant 3 : index
    %c11_620 = arith.constant 11 : index
    %c0_621 = arith.constant 0 : index
    %330 = vector.load %arg1[%c0_618, %c3_619, %c11_620, %c0_621] : memref<1x4x16x16xf32, #tpu.memory_space<vmem>>, vector<1x1x1x8xf32>
    %331 = vector.shape_cast %330 : vector<1x1x1x8xf32> to vector<1x8xf32>
    %c2_622 = arith.constant 2 : index
    %c216_623 = arith.constant 216 : index
    %332 = vector.load %arg5[%c2_622, %c216_623] : memref<4x256xf32, #tpu.memory_space<vmem>>, vector<1x8xf32>
    tpu.vector_store %arg5[%c2_622, %c216_623], %331 {strides = array<i32>} : memref<4x256xf32, #tpu.memory_space<vmem>>, vector<1x8xf32>,
    %c0_624 = arith.constant 0 : index
    %c3_625 = arith.constant 3 : index
    %c11_626 = arith.constant 11 : index
    %c8_627 = arith.constant 8 : index
    %333 = vector.load %arg1[%c0_624, %c3_625, %c11_626, %c8_627] : memref<1x4x16x16xf32, #tpu.memory_space<vmem>>, vector<1x1x1x8xf32>
    %334 = vector.shape_cast %333 : vector<1x1x1x8xf32> to vector<1x8xf32>
    %c3_628 = arith.constant 3 : index
    %c216_629 = arith.constant 216 : index
    %335 = vector.load %arg5[%c3_628, %c216_629] : memref<4x256xf32, #tpu.memory_space<vmem>>, vector<1x8xf32>
    tpu.vector_store %arg5[%c3_628, %c216_629], %334 {strides = array<i32>} : memref<4x256xf32, #tpu.memory_space<vmem>>, vector<1x8xf32>,
    %c0_630 = arith.constant 0 : index
    %c3_631 = arith.constant 3 : index
    %c4_632 = arith.constant 4 : index
    %c0_633 = arith.constant 0 : index
    %336 = vector.load %arg1[%c0_630, %c3_631, %c4_632, %c0_633] : memref<1x4x16x16xf32, #tpu.memory_space<vmem>>, vector<1x1x1x8xf32>
    %337 = vector.shape_cast %336 : vector<1x1x1x8xf32> to vector<1x8xf32>
    %c0_634 = arith.constant 0 : index
    %c224 = arith.constant 224 : index
    %338 = vector.load %arg5[%c0_634, %c224] : memref<4x256xf32, #tpu.memory_space<vmem>>, vector<1x8xf32>
    tpu.vector_store %arg5[%c0_634, %c224], %337 {strides = array<i32>} : memref<4x256xf32, #tpu.memory_space<vmem>>, vector<1x8xf32>,
    %c0_635 = arith.constant 0 : index
    %c3_636 = arith.constant 3 : index
    %c4_637 = arith.constant 4 : index
    %c8_638 = arith.constant 8 : index
    %339 = vector.load %arg1[%c0_635, %c3_636, %c4_637, %c8_638] : memref<1x4x16x16xf32, #tpu.memory_space<vmem>>, vector<1x1x1x8xf32>
    %340 = vector.shape_cast %339 : vector<1x1x1x8xf32> to vector<1x8xf32>
    %c1_639 = arith.constant 1 : index
    %c224_640 = arith.constant 224 : index
    %341 = vector.load %arg5[%c1_639, %c224_640] : memref<4x256xf32, #tpu.memory_space<vmem>>, vector<1x8xf32>
    tpu.vector_store %arg5[%c1_639, %c224_640], %340 {strides = array<i32>} : memref<4x256xf32, #tpu.memory_space<vmem>>, vector<1x8xf32>,
    %c0_641 = arith.constant 0 : index
    %c3_642 = arith.constant 3 : index
    %c12_643 = arith.constant 12 : index
    %c0_644 = arith.constant 0 : index
    %342 = vector.load %arg1[%c0_641, %c3_642, %c12_643, %c0_644] : memref<1x4x16x16xf32, #tpu.memory_space<vmem>>, vector<1x1x1x8xf32>
    %343 = vector.shape_cast %342 : vector<1x1x1x8xf32> to vector<1x8xf32>
    %c2_645 = arith.constant 2 : index
    %c224_646 = arith.constant 224 : index
    %344 = vector.load %arg5[%c2_645, %c224_646] : memref<4x256xf32, #tpu.memory_space<vmem>>, vector<1x8xf32>
    tpu.vector_store %arg5[%c2_645, %c224_646], %343 {strides = array<i32>} : memref<4x256xf32, #tpu.memory_space<vmem>>, vector<1x8xf32>,
    %c0_647 = arith.constant 0 : index
    %c3_648 = arith.constant 3 : index
    %c12_649 = arith.constant 12 : index
    %c8_650 = arith.constant 8 : index
    %345 = vector.load %arg1[%c0_647, %c3_648, %c12_649, %c8_650] : memref<1x4x16x16xf32, #tpu.memory_space<vmem>>, vector<1x1x1x8xf32>
    %346 = vector.shape_cast %345 : vector<1x1x1x8xf32> to vector<1x8xf32>
    %c3_651 = arith.constant 3 : index
    %c224_652 = arith.constant 224 : index
    %347 = vector.load %arg5[%c3_651, %c224_652] : memref<4x256xf32, #tpu.memory_space<vmem>>, vector<1x8xf32>
    tpu.vector_store %arg5[%c3_651, %c224_652], %346 {strides = array<i32>} : memref<4x256xf32, #tpu.memory_space<vmem>>, vector<1x8xf32>,
    %c0_653 = arith.constant 0 : index
    %c3_654 = arith.constant 3 : index
    %c5_655 = arith.constant 5 : index
    %c0_656 = arith.constant 0 : index
    %348 = vector.load %arg1[%c0_653, %c3_654, %c5_655, %c0_656] : memref<1x4x16x16xf32, #tpu.memory_space<vmem>>, vector<1x1x1x8xf32>
    %349 = vector.shape_cast %348 : vector<1x1x1x8xf32> to vector<1x8xf32>
    %c0_657 = arith.constant 0 : index
    %c232 = arith.constant 232 : index
    %350 = vector.load %arg5[%c0_657, %c232] : memref<4x256xf32, #tpu.memory_space<vmem>>, vector<1x8xf32>
    tpu.vector_store %arg5[%c0_657, %c232], %349 {strides = array<i32>} : memref<4x256xf32, #tpu.memory_space<vmem>>, vector<1x8xf32>,
    %c0_658 = arith.constant 0 : index
    %c3_659 = arith.constant 3 : index
    %c5_660 = arith.constant 5 : index
    %c8_661 = arith.constant 8 : index
    %351 = vector.load %arg1[%c0_658, %c3_659, %c5_660, %c8_661] : memref<1x4x16x16xf32, #tpu.memory_space<vmem>>, vector<1x1x1x8xf32>
    %352 = vector.shape_cast %351 : vector<1x1x1x8xf32> to vector<1x8xf32>
    %c1_662 = arith.constant 1 : index
    %c232_663 = arith.constant 232 : index
    %353 = vector.load %arg5[%c1_662, %c232_663] : memref<4x256xf32, #tpu.memory_space<vmem>>, vector<1x8xf32>
    tpu.vector_store %arg5[%c1_662, %c232_663], %352 {strides = array<i32>} : memref<4x256xf32, #tpu.memory_space<vmem>>, vector<1x8xf32>,
    %c0_664 = arith.constant 0 : index
    %c3_665 = arith.constant 3 : index
    %c13_666 = arith.constant 13 : index
    %c0_667 = arith.constant 0 : index
    %354 = vector.load %arg1[%c0_664, %c3_665, %c13_666, %c0_667] : memref<1x4x16x16xf32, #tpu.memory_space<vmem>>, vector<1x1x1x8xf32>
    %355 = vector.shape_cast %354 : vector<1x1x1x8xf32> to vector<1x8xf32>
    %c2_668 = arith.constant 2 : index
    %c232_669 = arith.constant 232 : index
    %356 = vector.load %arg5[%c2_668, %c232_669] : memref<4x256xf32, #tpu.memory_space<vmem>>, vector<1x8xf32>
    tpu.vector_store %arg5[%c2_668, %c232_669], %355 {strides = array<i32>} : memref<4x256xf32, #tpu.memory_space<vmem>>, vector<1x8xf32>,
    %c0_670 = arith.constant 0 : index
    %c3_671 = arith.constant 3 : index
    %c13_672 = arith.constant 13 : index
    %c8_673 = arith.constant 8 : index
    %357 = vector.load %arg1[%c0_670, %c3_671, %c13_672, %c8_673] : memref<1x4x16x16xf32, #tpu.memory_space<vmem>>, vector<1x1x1x8xf32>
    %358 = vector.shape_cast %357 : vector<1x1x1x8xf32> to vector<1x8xf32>
    %c3_674 = arith.constant 3 : index
    %c232_675 = arith.constant 232 : index
    %359 = vector.load %arg5[%c3_674, %c232_675] : memref<4x256xf32, #tpu.memory_space<vmem>>, vector<1x8xf32>
    tpu.vector_store %arg5[%c3_674, %c232_675], %358 {strides = array<i32>} : memref<4x256xf32, #tpu.memory_space<vmem>>, vector<1x8xf32>,
    %c0_676 = arith.constant 0 : index
    %c3_677 = arith.constant 3 : index
    %c6_678 = arith.constant 6 : index
    %c0_679 = arith.constant 0 : index
    %360 = vector.load %arg1[%c0_676, %c3_677, %c6_678, %c0_679] : memref<1x4x16x16xf32, #tpu.memory_space<vmem>>, vector<1x1x1x8xf32>
    %361 = vector.shape_cast %360 : vector<1x1x1x8xf32> to vector<1x8xf32>
    %c0_680 = arith.constant 0 : index
    %c240 = arith.constant 240 : index
    %362 = vector.load %arg5[%c0_680, %c240] : memref<4x256xf32, #tpu.memory_space<vmem>>, vector<1x8xf32>
    tpu.vector_store %arg5[%c0_680, %c240], %361 {strides = array<i32>} : memref<4x256xf32, #tpu.memory_space<vmem>>, vector<1x8xf32>,
    %c0_681 = arith.constant 0 : index
    %c3_682 = arith.constant 3 : index
    %c6_683 = arith.constant 6 : index
    %c8_684 = arith.constant 8 : index
    %363 = vector.load %arg1[%c0_681, %c3_682, %c6_683, %c8_684] : memref<1x4x16x16xf32, #tpu.memory_space<vmem>>, vector<1x1x1x8xf32>
    %364 = vector.shape_cast %363 : vector<1x1x1x8xf32> to vector<1x8xf32>
    %c1_685 = arith.constant 1 : index
    %c240_686 = arith.constant 240 : index
    %365 = vector.load %arg5[%c1_685, %c240_686] : memref<4x256xf32, #tpu.memory_space<vmem>>, vector<1x8xf32>
    tpu.vector_store %arg5[%c1_685, %c240_686], %364 {strides = array<i32>} : memref<4x256xf32, #tpu.memory_space<vmem>>, vector<1x8xf32>,
    %c0_687 = arith.constant 0 : index
    %c3_688 = arith.constant 3 : index
    %c14_689 = arith.constant 14 : index
    %c0_690 = arith.constant 0 : index
    %366 = vector.load %arg1[%c0_687, %c3_688, %c14_689, %c0_690] : memref<1x4x16x16xf32, #tpu.memory_space<vmem>>, vector<1x1x1x8xf32>
    %367 = vector.shape_cast %366 : vector<1x1x1x8xf32> to vector<1x8xf32>
    %c2_691 = arith.constant 2 : index
    %c240_692 = arith.constant 240 : index
    %368 = vector.load %arg5[%c2_691, %c240_692] : memref<4x256xf32, #tpu.memory_space<vmem>>, vector<1x8xf32>
    tpu.vector_store %arg5[%c2_691, %c240_692], %367 {strides = array<i32>} : memref<4x256xf32, #tpu.memory_space<vmem>>, vector<1x8xf32>,
    %c0_693 = arith.constant 0 : index
    %c3_694 = arith.constant 3 : index
    %c14_695 = arith.constant 14 : index
    %c8_696 = arith.constant 8 : index
    %369 = vector.load %arg1[%c0_693, %c3_694, %c14_695, %c8_696] : memref<1x4x16x16xf32, #tpu.memory_space<vmem>>, vector<1x1x1x8xf32>
    %370 = vector.shape_cast %369 : vector<1x1x1x8xf32> to vector<1x8xf32>
    %c3_697 = arith.constant 3 : index
    %c240_698 = arith.constant 240 : index
    %371 = vector.load %arg5[%c3_697, %c240_698] : memref<4x256xf32, #tpu.memory_space<vmem>>, vector<1x8xf32>
    tpu.vector_store %arg5[%c3_697, %c240_698], %370 {strides = array<i32>} : memref<4x256xf32, #tpu.memory_space<vmem>>, vector<1x8xf32>,
    %c0_699 = arith.constant 0 : index
    %c3_700 = arith.constant 3 : index
    %c7_701 = arith.constant 7 : index
    %c0_702 = arith.constant 0 : index
    %372 = vector.load %arg1[%c0_699, %c3_700, %c7_701, %c0_702] : memref<1x4x16x16xf32, #tpu.memory_space<vmem>>, vector<1x1x1x8xf32>
    %373 = vector.shape_cast %372 : vector<1x1x1x8xf32> to vector<1x8xf32>
    %c0_703 = arith.constant 0 : index
    %c248 = arith.constant 248 : index
    %374 = vector.load %arg5[%c0_703, %c248] : memref<4x256xf32, #tpu.memory_space<vmem>>, vector<1x8xf32>
    tpu.vector_store %arg5[%c0_703, %c248], %373 {strides = array<i32>} : memref<4x256xf32, #tpu.memory_space<vmem>>, vector<1x8xf32>,
    %c0_704 = arith.constant 0 : index
    %c3_705 = arith.constant 3 : index
    %c7_706 = arith.constant 7 : index
    %c8_707 = arith.constant 8 : index
    %375 = vector.load %arg1[%c0_704, %c3_705, %c7_706, %c8_707] : memref<1x4x16x16xf32, #tpu.memory_space<vmem>>, vector<1x1x1x8xf32>
    %376 = vector.shape_cast %375 : vector<1x1x1x8xf32> to vector<1x8xf32>
    %c1_708 = arith.constant 1 : index
    %c248_709 = arith.constant 248 : index
    %377 = vector.load %arg5[%c1_708, %c248_709] : memref<4x256xf32, #tpu.memory_space<vmem>>, vector<1x8xf32>
    tpu.vector_store %arg5[%c1_708, %c248_709], %376 {strides = array<i32>} : memref<4x256xf32, #tpu.memory_space<vmem>>, vector<1x8xf32>,
    %c0_710 = arith.constant 0 : index
    %c3_711 = arith.constant 3 : index
    %c15_712 = arith.constant 15 : index
    %c0_713 = arith.constant 0 : index
    %378 = vector.load %arg1[%c0_710, %c3_711, %c15_712, %c0_713] : memref<1x4x16x16xf32, #tpu.memory_space<vmem>>, vector<1x1x1x8xf32>
    %379 = vector.shape_cast %378 : vector<1x1x1x8xf32> to vector<1x8xf32>
    %c2_714 = arith.constant 2 : index
    %c248_715 = arith.constant 248 : index
    %380 = vector.load %arg5[%c2_714, %c248_715] : memref<4x256xf32, #tpu.memory_space<vmem>>, vector<1x8xf32>
    tpu.vector_store %arg5[%c2_714, %c248_715], %379 {strides = array<i32>} : memref<4x256xf32, #tpu.memory_space<vmem>>, vector<1x8xf32>,
    %c0_716 = arith.constant 0 : index
    %c3_717 = arith.constant 3 : index
    %c15_718 = arith.constant 15 : index
    %c8_719 = arith.constant 8 : index
    %381 = vector.load %arg1[%c0_716, %c3_717, %c15_718, %c8_719] : memref<1x4x16x16xf32, #tpu.memory_space<vmem>>, vector<1x1x1x8xf32>
    %382 = vector.shape_cast %381 : vector<1x1x1x8xf32> to vector<1x8xf32>
    %c3_720 = arith.constant 3 : index
    %c248_721 = arith.constant 248 : index
    %383 = vector.load %arg5[%c3_720, %c248_721] : memref<4x256xf32, #tpu.memory_space<vmem>>, vector<1x8xf32>
    tpu.vector_store %arg5[%c3_720, %c248_721], %382 {strides = array<i32>} : memref<4x256xf32, #tpu.memory_space<vmem>>, vector<1x8xf32>,
    %c0_722 = arith.constant 0 : index
    %c0_723 = arith.constant 0 : index
    %384 = vector.load %arg5[%c0_722, %c0_723] : memref<4x256xf32, #tpu.memory_space<vmem>>, vector<4x256xf32>
    %385 = arith.truncf %384 : vector<4x256xf32> to vector<4x256xbf16>
    %c0_724 = arith.constant 0 : index
    %c0_725 = arith.constant 0 : index
    %386 = vector.load %arg2[%c0_724, %c0_725] : memref<256x256xbf16, #tpu.memory_space<vmem>>, vector<256x256xbf16>
    %cst = arith.constant dense<0.000000e+00> : vector<4x256xf32>
    %387 = tpu.matmul %385, %386, %cst {dimension_numbers = #tpu.dot_dimension_numbers<[1], [0], [0], [1], [0, 0, 1, 1], [], []>} : vector<4x256xbf16>, vector<256x256xbf16>, vector<4x256xf32> -> vector<4x256xf32>
    %c0_726 = arith.constant 0 : index
    %c0_727 = arith.constant 0 : index
    %388 = vector.load %arg3[%c0_726, %c0_727] : memref<1x256xf32, #tpu.memory_space<vmem>>, vector<1x256xf32>
    %389 = vector.broadcast %388 : vector<1x256xf32> to vector<4x256xf32>
    %390 = arith.addf %387, %389 : vector<4x256xf32>
    %c0_728 = arith.constant 0 : index
    %c0_729 = arith.constant 0 : index
    %c0_730 = arith.constant 0 : index
    %391 = vector.load %arg4[%c0_728, %c0_729, %c0_730] : memref<1x4x256xf32, #tpu.memory_space<vmem>>, vector<1x4x256xf32>
    %392 = vector.shape_cast %391 : vector<1x4x256xf32> to vector<4x256xf32>
    %393 = vector.shape_cast %390 : vector<4x256xf32> to vector<1x4x256xf32>
    tpu.vector_store %arg4[%c0_728, %c0_729, %c0_730], %393 {strides = array<i32>} : memref<1x4x256xf32, #tpu.memory_space<vmem>>, vector<1x4x256xf32>,
    return
  }
  func.func @transform_0(%arg0: i32) -> (i32, i32, i32, i32) {
    %c0_i32 = arith.constant 0 : i32
    %c0_i32_0 = arith.constant 0 : i32
    %c0_i32_1 = arith.constant 0 : i32
    %c0_i32_2 = arith.constant 0 : i32
    return %arg0, %c0_i32, %c0_i32_0, %c0_i32_1 : i32, i32, i32, i32
  }
  func.func @transform_1(%arg0: i32) -> (i32, i32) {
    %c0_i32 = arith.constant 0 : i32
    %c0_i32_0 = arith.constant 0 : i32
    %c0_i32_1 = arith.constant 0 : i32
    return %c0_i32, %c0_i32_0 : i32, i32
  }
  func.func @transform_2(%arg0: i32) -> (i32, i32) {
    %c0_i32 = arith.constant 0 : i32
    %c0_i32_0 = arith.constant 0 : i32
    %c0_i32_1 = arith.constant 0 : i32
    return %c0_i32, %c0_i32_0 : i32, i32
  }
  func.func @transform_3(%arg0: i32) -> (i32, i32, i32) {
    %c0_i32 = arith.constant 0 : i32
    %c0_i32_0 = arith.constant 0 : i32
    %c0_i32_1 = arith.constant 0 : i32
    return %arg0, %c0_i32, %c0_i32_0 : i32, i32, i32
  }
}

</mosaic_0001>

<llo_original>
// kernel: tpu_custom_call.1
$region0: #{tpu_custom_call.1}
  #allocation0 [shape = 'u32[]', space=smem, size = 0x4, offset = 0x4, fixed_abs, tag = 'smem constant byte address 0x4 - core index']
  #allocation1 [shape = 'u32[144,128]{1,0:T(1,128)}', space=vmem, size = 0x12000, scoped, tag = 'internal scratch']
  #allocation2 [shape = 'f32[4,256]{1,0:T(4,128)}', space=vmem, size = 0x1000, scoped, tag = 'scratch operand']
  %s0 = inlined_call_operand.hbm [shape: f32[2,4,16,16], index: 0, kind: input, shape index: {}]
  %s1 = inlined_call_operand.hbm [shape: bf16[256,256], index: 1, kind: input, shape index: {}]
  %s2 = inlined_call_operand.vmem [shape: f32[1,256], index: 2, kind: input, shape index: {}]
  %s3 = inlined_call_operand.hbm [shape: f32[2,4,256], index: 3, kind: output, shape index: {}]
  %s4 = sld [smem:[#allocation0]]
  $region53: #{tpu_custom_call.1} parent=0
    _
  %s6 = ssub.s32 1, %s4
  %s7 = scalar_select 0, %s6, %s4
  $region1: #{tpu_custom_call.1} parent=0
    #allocation3 [shape = 'u8[65536]{0}', space=vmem, size = 0x10000, scoped, tag = 'input window, operand 0']
    #allocation4 [shape = 's32[2]{0}', space=sflag, size = 0x8, scoped, tag = 'scoped memory for tpu_custom_call.1']
    #allocation5 [shape = 's32[2]{0}', space=sflag, size = 0x8, scoped, tag = 'scoped memory for tpu_custom_call.1']
    #allocation6 [shape = 'u8[131072]{0}', space=vmem, size = 0x20000, scoped, tag = 'input window, operand 1, single buffered']
    #allocation7 [shape = 's32[1]{0}', space=sflag, size = 0x4, scoped, tag = 'scoped memory for tpu_custom_call.1']
    #allocation8 [shape = 'u8[8192]{0}', space=vmem, size = 0x2000, scoped, tag = 'output window, operand 0']
    %8 = vsyncpa [#allocation4], 0
    %s9 = scalar_lea.sflag [#allocation4], 1
    %10 = vsyncpa %s9, 0
    %11 = vsyncpa [#allocation7], 0
    %12 = vsyncpa [#allocation5], 0
    %s13 = scalar_lea.sflag [#allocation5], 1
    %14 = vsyncpa %s13, 0
    loop: start=0, step=1, limit=4
    $region2: #{tpu_custom_call.1} parent=1 // loop_pre_header
      _
    $region3: #{tpu_custom_call.1} parent=1 // loop_header
      %s16 = sphi 0, %s20
      %p17 = scmp.ge.s32.totalorder %s16, 4
      %s26 = sphi 0, %s28
      %s29 = sphi 0, %s26
      %s30 = sphi 0, %s29
      %s46 = sphi 0, %s30
      %s50 = sphi 0, %s50
      %s52 = sphi 0, %s50
      %s53 = sphi 0, %s52
      %s67 = sphi 0, %s53
      %s71 = sphi 0, %s71
      %s73 = sphi 0, %s71
      %s74 = sphi 0, %s73
      %s88 = sphi 0, %s74
      %s94 = sphi 0, %s96
      %s97 = sphi 0, %s94
      %s98 = sphi 0, %s97
      %s114 = sphi 0, %s98
    $region4: #{tpu_custom_call.1} parent=1 // loop_header_branch
      %19 = sbr.rel (%p17) target = $region8
    $region5: #{tpu_custom_call.1} parent=1 // loop_body
      %s21 = ssub.s32 %s16, 1
      %s22 = ssub.s32 %s16, 2
      %s23 = sadd.s32 %s16, 1
      %s24 = ssub.s32 %s16, %s23
      %p25 = scmp.eq.s32.totalorder %s24, 0
      %s27 = sadd.s32 %s26, 1
      %s28 = scalar_select %p25, %s26, %s27
      %p31 = pneg %p25
      %p32 = scmp.eq.s32.totalorder %s16, 1
      %p33 = por %p31, %p32
      %p34 = scmp.ne.s32.totalorder %s26, %s29
      %p35 = scmp.eq.s32.totalorder %s16, 0
      %p36 = por %p34, %p35
      %p37 = scmp.ne.s32.totalorder %s26, %s29
      %p38 = scmp.eq.s32.totalorder %s21, 1
      %p39 = por %p37, %p38
      %p40 = scmp.ne.s32.totalorder %s29, %s30
      %p41 = scmp.eq.s32.totalorder %s21, 0
      %p42 = por %p40, %p41
      %p43 = scmp.ne.s32.totalorder %s29, %s30
      %p44 = scmp.eq.s32.totalorder %s22, 1
      %p45 = por %p43, %p44
      %p47 = scmp.ne.s32.totalorder %s30, %s46
      %p48 = scmp.eq.s32.totalorder %s22, 0
      %p49 = por %p47, %p48
      %s51 = sadd.s32 %s50, 1
      %p54 = scmp.eq.s32.totalorder %s16, 1
      %p55 = scmp.ne.s32.totalorder %s50, %s52
      %p56 = scmp.eq.s32.totalorder %s16, 0
      %p57 = por %p55, %p56
      %p58 = scmp.ne.s32.totalorder %s50, %s52
      %p59 = scmp.eq.s32.totalorder %s21, 1
      %p60 = por %p58, %p59
      %p61 = scmp.ne.s32.totalorder %s52, %s53
      %p62 = scmp.eq.s32.totalorder %s21, 0
      %p63 = por %p61, %p62
      %p64 = scmp.ne.s32.totalorder %s52, %s53
      %p65 = scmp.eq.s32.totalorder %s22, 1
      %p66 = por %p64, %p65
      %p68 = scmp.ne.s32.totalorder %s53, %s67
      %p69 = scmp.eq.s32.totalorder %s22, 0
      %p70 = por %p68, %p69
      %s72 = sadd.s32 %s71, 1
      %p75 = scmp.eq.s32.totalorder %s16, 1
      %p76 = scmp.ne.s32.totalorder %s71, %s73
      %p77 = scmp.eq.s32.totalorder %s16, 0
      %p78 = por %p76, %p77
      %p79 = scmp.ne.s32.totalorder %s71, %s73
      %p80 = scmp.eq.s32.totalorder %s21, 1
      %p81 = por %p79, %p80
      %p82 = scmp.ne.s32.totalorder %s73, %s74
      %p83 = scmp.eq.s32.totalorder %s21, 0
      %p84 = por %p82, %p83
      %p85 = scmp.ne.s32.totalorder %s73, %s74
      %p86 = scmp.eq.s32.totalorder %s22, 1
      %p87 = por %p85, %p86
      %p89 = scmp.ne.s32.totalorder %s74, %s88
      %p90 = scmp.eq.s32.totalorder %s22, 0
      %p91 = por %p89, %p90
      %s92 = ssub.s32 %s16, %s23
      %p93 = scmp.eq.s32.totalorder %s92, 0
      %s95 = sadd.s32 %s94, 1
      %s96 = scalar_select %p93, %s94, %s95
      %p99 = pneg %p93
      %p100 = scmp.eq.s32.totalorder %s16, 1
      %p101 = por %p99, %p100
      %p102 = scmp.ne.s32.totalorder %s94, %s97
      %p103 = scmp.eq.s32.totalorder %s16, 0
      %p104 = por %p102, %p103
      %p105 = scmp.ne.s32.totalorder %s94, %s97
      %p106 = scmp.eq.s32.totalorder %s21, 1
      %p107 = por %p105, %p106
      %p108 = scmp.ne.s32.totalorder %s97, %s98
      %p109 = scmp.eq.s32.totalorder %s21, 0
      %p110 = por %p108, %p109
      %p111 = scmp.ne.s32.totalorder %s97, %s98
      %p112 = scmp.eq.s32.totalorder %s22, 1
      %p113 = por %p111, %p112
      %p115 = scmp.ne.s32.totalorder %s98, %s114
      %p116 = scmp.eq.s32.totalorder %s22, 0
      %p117 = por %p115, %p116
      %p118 = scmp.le.s32.totalorder 1, %s16
      %p119 = scmp.lt.s32.totalorder %s16, 3
      %p120 = pnand %p118, %p119
      %p121 = pneg %p120
      // Predicated region
      $region9: #{tpu_custom_call.1} parent=5 // pred_check
        _
      $region10: #{tpu_custom_call.1} parent=5 // pred_check_branch
        %123 = sbr.rel (%p120) target = $region12
      $region11: #{tpu_custom_call.1} parent=5 // pred_region
        %s124 = ssub.s32 %s16, 1
        // Predicated region
        $region13: #{tpu_custom_call.1} parent=11 // pred_check
          %p125 = pneg %p63
        $region14: #{tpu_custom_call.1} parent=11 // pred_check_branch
          %127 = sbr.rel (%p125) target = $region16
        $region15: #{tpu_custom_call.1} parent=11 // pred_region
          %s129 = ssub.s32 4096, 4096
          %130 = vsyncadd [#allocation7], %s129
          %s131 = sshll.u32 [#allocation6], 4
          %s132 = int_to_ptr.vmem [resolvable:$true] %s131
          %137 = dma.hbm_to_vmem [thread:$0]  %s1, 4096, %s132, [#allocation7], 128, 128, 8
        $region16: #{tpu_custom_call.1} parent=11 // pred_fallthru
          _
        // Predicated region
        $region17: #{tpu_custom_call.1} parent=11 // pred_check
          %p138 = pneg %p84
        $region18: #{tpu_custom_call.1} parent=11 // pred_check_branch
          %140 = sbr.rel (%p138) target = $region20
        $region19: #{tpu_custom_call.1} parent=11 // pred_region
          _
        $region20: #{tpu_custom_call.1} parent=11 // pred_fallthru
          _
      $region12: #{tpu_custom_call.1} parent=5 // pred_fallthru
        _
      %p141 = scmp.lt.s32.totalorder %s16, 2
      // Predicated region
      $region21: #{tpu_custom_call.1} parent=5 // pred_check
        %p142 = pneg %p141
      $region22: #{tpu_custom_call.1} parent=5 // pred_check_branch
        %144 = sbr.rel (%p142) target = $region24
      $region23: #{tpu_custom_call.1} parent=5 // pred_region
        // Predicated region
        $region25: #{tpu_custom_call.1} parent=23 // pred_check
          %p145 = pneg %p36
        $region26: #{tpu_custom_call.1} parent=23 // pred_check_branch
          %147 = sbr.rel (%p145) target = $region28
        $region27: #{tpu_custom_call.1} parent=23 // pred_region
          %s148 = sand.u32 %s26, 1
          %s149 = scalar_lea.sflag [#allocation4], %s148
          %s150 = sand.u32 %s26, 1
          %s151 = smul.addr %s150, 64
          %s152 = scalar_lea.vmem [#allocation3], %s151
          %s154 = ssub.s32 1024, 1024
          %155 = vsyncadd %s149, %s154
          %s156 = smul.addr %s16, 8
          %s157 = smul.addr %s156, 128
          %s158 = scalar_lea.hbm %s0, %s157
          %s159 = sshll.u32 %s152, 4
          %s160 = int_to_ptr.vmem [resolvable:$true] %s159
          %165 = dma.hbm_to_vmem [thread:$0]  %s158, 1024, %s160, %s149, 128, 128, 8
        $region28: #{tpu_custom_call.1} parent=23 // pred_fallthru
          _
      $region24: #{tpu_custom_call.1} parent=5 // pred_fallthru
        _
      %p166 = scmp.le.s32.totalorder 1, %s16
      %p167 = scmp.lt.s32.totalorder %s16, 3
      %p168 = pnand %p166, %p167
      %p169 = pneg %p168
      // Predicated region
      $region29: #{tpu_custom_call.1} parent=5 // pred_check
        _
      $region30: #{tpu_custom_call.1} parent=5 // pred_check_branch
        %171 = sbr.rel (%p168) target = $region32
      $region31: #{tpu_custom_call.1} parent=5 // pred_region
        %s172 = ssub.s32 %s16, 1
        %s173 = sand.u32 %s29, 1
        %s174 = scalar_lea.sflag [#allocation4], %s173
        %s175 = sand.u32 %s29, 1
        %s176 = smul.addr %s175, 64
        %s177 = scalar_lea.vmem [#allocation3], %s176
        // Predicated region
        $region33: #{tpu_custom_call.1} parent=31 // pred_check
          %p178 = pneg %p42
        $region34: #{tpu_custom_call.1} parent=31 // pred_check_branch
          %180 = sbr.rel (%p178) target = $region36
        $region35: #{tpu_custom_call.1} parent=31 // pred_region
          %181 = dma.done %s174, 1024
        $region36: #{tpu_custom_call.1} parent=31 // pred_fallthru
          _
        // Predicated region
        $region37: #{tpu_custom_call.1} parent=31 // pred_check
          %p182 = pneg %p63
        $region38: #{tpu_custom_call.1} parent=31 // pred_check_branch
          %184 = sbr.rel (%p182) target = $region40
        $region39: #{tpu_custom_call.1} parent=31 // pred_region
          %185 = dma.done [#allocation7], 4096
        $region40: #{tpu_custom_call.1} parent=31 // pred_fallthru
          _
        %s186 = sand.u32 %s29, 1
        %s187 = scalar_lea.sflag [#allocation4], %s186
        %s188 = sand.u32 %s29, 1
        %s189 = smul.addr %s188, 64
        %s190 = scalar_lea.vmem [#allocation3], %s189
        %p191 = pneg %p42
        %p192 = pneg %p39
        %p193 = pneg %p63
        %p194 = pneg %p60
        %p195 = pneg %p84
        %p196 = pneg %p81
        %p197 = pneg %p110
        %p198 = pneg %p107
        %s199 = sand.u32 %s97, 1
        %s200 = scalar_lea.sflag [#allocation5], %s199
        %s201 = sand.u32 %s97, 1
        %s202 = smul.addr %s201, 8
        %s203 = scalar_lea.vmem [#allocation8], %s202
        %v204 = vld [vmem:[%s177] sm:$0x1]
        %vm205 = vcmask 57344
        %206 = vst.msk [vmem:[#allocation2] sm:$0x1] %vm205, %v204
        %v207 = vld [vmem:[%s177] sm:$0x1]
        %209 = vrot.lane.b32.xlu0 %v207, 120
        %v210 = vpop.permute.xlu0 %209
        %212 = vst.msk [vmem:[#allocation2 + $0x1] sm:$0x1] %vm205, %v210
        %v213 = vld [vmem:[%s177 + $0x8] sm:$0x1]
        %214 = vst.msk [vmem:[#allocation2 + $0x2] sm:$0x1] %vm205, %v213
        %v215 = vld [vmem:[%s177 + $0x8] sm:$0x1]
        %217 = vrot.lane.b32.xlu0 %v215, 120
        %v218 = vpop.permute.xlu0 %217
        %220 = vst.msk [vmem:[#allocation2 + $0x3] sm:$0x1] %vm205, %v218
        %v221 = vld [vmem:[%s177 + $0x1] sm:$0x1]
        %223 = vrot.lane.b32.xlu0 %v221, 8
        %v224 = vpop.permute.xlu0 %223
        %vm226 = vcmask 122944
        %227 = vst.msk [vmem:[#allocation2] sm:$0x1] %vm226, %v224
        %v228 = vld [vmem:[%s177 + $0x1] sm:$0x1]
        %229 = vst.msk [vmem:[#allocation2 + $0x1] sm:$0x1] %vm226, %v228
        %v230 = vld [vmem:[%s177 + $0x9] sm:$0x1]
        %232 = vrot.lane.b32.xlu0 %v230, 8
        %v233 = vpop.permute.xlu0 %232
        %235 = vst.msk [vmem:[#allocation2 + $0x2] sm:$0x1] %vm226, %v233
        %v236 = vld [vmem:[%s177 + $0x9] sm:$0x1]
        %237 = vst.msk [vmem:[#allocation2 + $0x3] sm:$0x1] %vm226, %v236
        %v238 = vld [vmem:[%s177 + $0x2] sm:$0x1]
        %240 = vrot.lane.b32.xlu0 %v238, 16
        %v241 = vpop.permute.xlu0 %240
        %vm243 = vcmask 188544
        %244 = vst.msk [vmem:[#allocation2] sm:$0x1] %vm243, %v241
        %v245 = vld [vmem:[%s177 + $0x2] sm:$0x1]
        %247 = vrot.lane.b32.xlu0 %v245, 8
        %v248 = vpop.permute.xlu0 %247
        %250 = vst.msk [vmem:[#allocation2 + $0x1] sm:$0x1] %vm243, %v248
        %v251 = vld [vmem:[%s177 + $0xa] sm:$0x1]
        %253 = vrot.lane.b32.xlu0 %v251, 16
        %v254 = vpop.permute.xlu0 %253
        %256 = vst.msk [vmem:[#allocation2 + $0x2] sm:$0x1] %vm243, %v254
        %v257 = vld [vmem:[%s177 + $0xa] sm:$0x1]
        %259 = vrot.lane.b32.xlu0 %v257, 8
        %v260 = vpop.permute.xlu0 %259
        %262 = vst.msk [vmem:[#allocation2 + $0x3] sm:$0x1] %vm243, %v260
        %v263 = vld [vmem:[%s177 + $0x3] sm:$0x1]
        %265 = vrot.lane.b32.xlu0 %v263, 24
        %v266 = vpop.permute.xlu0 %265
        %vm268 = vcmask 254144
        %269 = vst.msk [vmem:[#allocation2] sm:$0x1] %vm268, %v266
        %v270 = vld [vmem:[%s177 + $0x3] sm:$0x1]
        %272 = vrot.lane.b32.xlu0 %v270, 16
        %v273 = vpop.permute.xlu0 %272
        %275 = vst.msk [vmem:[#allocation2 + $0x1] sm:$0x1] %vm268, %v273
        %v276 = vld [vmem:[%s177 + $0xb] sm:$0x1]
        %278 = vrot.lane.b32.xlu0 %v276, 24
        %v279 = vpop.permute.xlu0 %278
        %281 = vst.msk [vmem:[#allocation2 + $0x2] sm:$0x1] %vm268, %v279
        %v282 = vld [vmem:[%s177 + $0xb] sm:$0x1]
        %284 = vrot.lane.b32.xlu0 %v282, 16
        %v285 = vpop.permute.xlu0 %284
        %287 = vst.msk [vmem:[#allocation2 + $0x3] sm:$0x1] %vm268, %v285
        %v288 = vld [vmem:[%s177 + $0x4] sm:$0x1]
        %290 = vrot.lane.b32.xlu0 %v288, 32
        %v291 = vpop.permute.xlu0 %290
        %vm293 = vcmask 319744
        %294 = vst.msk [vmem:[#allocation2] sm:$0x1] %vm293, %v291
        %v295 = vld [vmem:[%s177 + $0x4] sm:$0x1]
        %297 = vrot.lane.b32.xlu0 %v295, 24
        %v298 = vpop.permute.xlu0 %297
        %300 = vst.msk [vmem:[#allocation2 + $0x1] sm:$0x1] %vm293, %v298
        %v301 = vld [vmem:[%s177 + $0xc] sm:$0x1]
        %303 = vrot.lane.b32.xlu0 %v301, 32
        %v304 = vpop.permute.xlu0 %303
        %306 = vst.msk [vmem:[#allocation2 + $0x2] sm:$0x1] %vm293, %v304
        %v307 = vld [vmem:[%s177 + $0xc] sm:$0x1]
        %309 = vrot.lane.b32.xlu0 %v307, 24
        %v310 = vpop.permute.xlu0 %309
        %312 = vst.msk [vmem:[#allocation2 + $0x3] sm:$0x1] %vm293, %v310
        %v313 = vld [vmem:[%s177 + $0x5] sm:$0x1]
        %315 = vrot.lane.b32.xlu0 %v313, 40
        %v316 = vpop.permute.xlu0 %315
        %vm318 = vcmask 385344
        %319 = vst.msk [vmem:[#allocation2] sm:$0x1] %vm318, %v316
        %v320 = vld [vmem:[%s177 + $0x5] sm:$0x1]
        %322 = vrot.lane.b32.xlu0 %v320, 32
        %v323 = vpop.permute.xlu0 %322
        %325 = vst.msk [vmem:[#allocation2 + $0x1] sm:$0x1] %vm318, %v323
        %v326 = vld [vmem:[%s177 + $0xd] sm:$0x1]
        %328 = vrot.lane.b32.xlu0 %v326, 40
        %v329 = vpop.permute.xlu0 %328
        %331 = vst.msk [vmem:[#allocation2 + $0x2] sm:$0x1] %vm318, %v329
        %v332 = vld [vmem:[%s177 + $0xd] sm:$0x1]
        %334 = vrot.lane.b32.xlu0 %v332, 32
        %v335 = vpop.permute.xlu0 %334
        %337 = vst.msk [vmem:[#allocation2 + $0x3] sm:$0x1] %vm318, %v335
        %v338 = vld [vmem:[%s177 + $0x6] sm:$0x1]
        %340 = vrot.lane.b32.xlu0 %v338, 48
        %v341 = vpop.permute.xlu0 %340
        %vm343 = vcmask 450944
        %344 = vst.msk [vmem:[#allocation2] sm:$0x1] %vm343, %v341
        %v345 = vld [vmem:[%s177 + $0x6] sm:$0x1]
        %347 = vrot.lane.b32.xlu0 %v345, 40
        %v348 = vpop.permute.xlu0 %347
        %350 = vst.msk [vmem:[#allocation2 + $0x1] sm:$0x1] %vm343, %v348
        %v351 = vld [vmem:[%s177 + $0xe] sm:$0x1]
        %353 = vrot.lane.b32.xlu0 %v351, 48
        %v354 = vpop.permute.xlu0 %353
        %356 = vst.msk [vmem:[#allocation2 + $0x2] sm:$0x1] %vm343, %v354
        %v357 = vld [vmem:[%s177 + $0xe] sm:$0x1]
        %359 = vrot.lane.b32.xlu0 %v357, 40
        %v360 = vpop.permute.xlu0 %359
        %362 = vst.msk [vmem:[#allocation2 + $0x3] sm:$0x1] %vm343, %v360
        %v363 = vld [vmem:[%s177 + $0x7] sm:$0x1]
        %365 = vrot.lane.b32.xlu0 %v363, 56
        %v366 = vpop.permute.xlu0 %365
        %vm368 = vcmask 516544
        %369 = vst.msk [vmem:[#allocation2] sm:$0x1] %vm368, %v366
        %v370 = vld [vmem:[%s177 + $0x7] sm:$0x1]
        %372 = vrot.lane.b32.xlu0 %v370, 48
        %v373 = vpop.permute.xlu0 %372
        %375 = vst.msk [vmem:[#allocation2 + $0x1] sm:$0x1] %vm368, %v373
        %v376 = vld [vmem:[%s177 + $0xf] sm:$0x1]
        %378 = vrot.lane.b32.xlu0 %v376, 56
        %v379 = vpop.permute.xlu0 %378
        %381 = vst.msk [vmem:[#allocation2 + $0x2] sm:$0x1] %vm368, %v379
        %v382 = vld [vmem:[%s177 + $0xf] sm:$0x1]
        %384 = vrot.lane.b32.xlu0 %v382, 48
        %v385 = vpop.permute.xlu0 %384
        %387 = vst.msk [vmem:[#allocation2 + $0x3] sm:$0x1] %vm368, %v385
        %s388 = scalar_lea.vmem %s177, 16 [#allocation3]
        %v389 = vld [vmem:[%s388] sm:$0x1]
        %391 = vrot.lane.b32.xlu0 %v389, 64
        %v392 = vpop.permute.xlu0 %391
        %vm394 = vcmask 582144
        %395 = vst.msk [vmem:[#allocation2] sm:$0x1] %vm394, %v392
        %v396 = vld [vmem:[%s388] sm:$0x1]
        %398 = vrot.lane.b32.xlu0 %v396, 56
        %v399 = vpop.permute.xlu0 %398
        %401 = vst.msk [vmem:[#allocation2 + $0x1] sm:$0x1] %vm394, %v399
        %v402 = vld [vmem:[%s388 + $0x8] sm:$0x1]
        %404 = vrot.lane.b32.xlu0 %v402, 64
        %v405 = vpop.permute.xlu0 %404
        %407 = vst.msk [vmem:[#allocation2 + $0x2] sm:$0x1] %vm394, %v405
        %v408 = vld [vmem:[%s388 + $0x8] sm:$0x1]
        %410 = vrot.lane.b32.xlu0 %v408, 56
        %v411 = vpop.permute.xlu0 %410
        %413 = vst.msk [vmem:[#allocation2 + $0x3] sm:$0x1] %vm394, %v411
        %v414 = vld [vmem:[%s388 + $0x1] sm:$0x1]
        %416 = vrot.lane.b32.xlu0 %v414, 72
        %v417 = vpop.permute.xlu0 %416
        %vm419 = vcmask 647744
        %420 = vst.msk [vmem:[#allocation2] sm:$0x1] %vm419, %v417
        %v421 = vld [vmem:[%s388 + $0x1] sm:$0x1]
        %423 = vrot.lane.b32.xlu0 %v421, 64
        %v424 = vpop.permute.xlu0 %423
        %426 = vst.msk [vmem:[#allocation2 + $0x1] sm:$0x1] %vm419, %v424
        %v427 = vld [vmem:[%s388 + $0x9] sm:$0x1]
        %429 = vrot.lane.b32.xlu0 %v427, 72
        %v430 = vpop.permute.xlu0 %429
        %432 = vst.msk [vmem:[#allocation2 + $0x2] sm:$0x1] %vm419, %v430
        %v433 = vld [vmem:[%s388 + $0x9] sm:$0x1]
        %435 = vrot.lane.b32.xlu0 %v433, 64
        %v436 = vpop.permute.xlu0 %435
        %438 = vst.msk [vmem:[#allocation2 + $0x3] sm:$0x1] %vm419, %v436
        %v439 = vld [vmem:[%s388 + $0x2] sm:$0x1]
        %441 = vrot.lane.b32.xlu0 %v439, 80
        %v442 = vpop.permute.xlu0 %441
        %vm444 = vcmask 713344
        %445 = vst.msk [vmem:[#allocation2] sm:$0x1] %vm444, %v442
        %v446 = vld [vmem:[%s388 + $0x2] sm:$0x1]
        %448 = vrot.lane.b32.xlu0 %v446, 72
        %v449 = vpop.permute.xlu0 %448
        %451 = vst.msk [vmem:[#allocation2 + $0x1] sm:$0x1] %vm444, %v449
        %v452 = vld [vmem:[%s388 + $0xa] sm:$0x1]
        %454 = vrot.lane.b32.xlu0 %v452, 80
        %v455 = vpop.permute.xlu0 %454
        %457 = vst.msk [vmem:[#allocation2 + $0x2] sm:$0x1] %vm444, %v455
        %v458 = vld [vmem:[%s388 + $0xa] sm:$0x1]
        %460 = vrot.lane.b32.xlu0 %v458, 72
        %v461 = vpop.permute.xlu0 %460
        %463 = vst.msk [vmem:[#allocation2 + $0x3] sm:$0x1] %vm444, %v461
        %v464 = vld [vmem:[%s388 + $0x3] sm:$0x1]
        %466 = vrot.lane.b32.xlu0 %v464, 88
        %v467 = vpop.permute.xlu0 %466
        %vm469 = vcmask 778944
        %470 = vst.msk [vmem:[#allocation2] sm:$0x1] %vm469, %v467
        %v471 = vld [vmem:[%s388 + $0x3] sm:$0x1]
        %473 = vrot.lane.b32.xlu0 %v471, 80
        %v474 = vpop.permute.xlu0 %473
        %476 = vst.msk [vmem:[#allocation2 + $0x1] sm:$0x1] %vm469, %v474
        %v477 = vld [vmem:[%s388 + $0xb] sm:$0x1]
        %479 = vrot.lane.b32.xlu0 %v477, 88
        %v480 = vpop.permute.xlu0 %479
        %482 = vst.msk [vmem:[#allocation2 + $0x2] sm:$0x1] %vm469, %v480
        %v483 = vld [vmem:[%s388 + $0xb] sm:$0x1]
        %485 = vrot.lane.b32.xlu0 %v483, 80
        %v486 = vpop.permute.xlu0 %485
        %488 = vst.msk [vmem:[#allocation2 + $0x3] sm:$0x1] %vm469, %v486
        %v489 = vld [vmem:[%s388 + $0x4] sm:$0x1]
        %491 = vrot.lane.b32.xlu0 %v489, 96
        %v492 = vpop.permute.xlu0 %491
        %vm494 = vcmask 844544
        %495 = vst.msk [vmem:[#allocation2] sm:$0x1] %vm494, %v492
        %v496 = vld [vmem:[%s388 + $0x4] sm:$0x1]
        %498 = vrot.lane.b32.xlu0 %v496, 88
        %v499 = vpop.permute.xlu0 %498
        %501 = vst.msk [vmem:[#allocation2 + $0x1] sm:$0x1] %vm494, %v499
        %v502 = vld [vmem:[%s388 + $0xc] sm:$0x1]
        %504 = vrot.lane.b32.xlu0 %v502, 96
        %v505 = vpop.permute.xlu0 %504
        %507 = vst.msk [vmem:[#allocation2 + $0x2] sm:$0x1] %vm494, %v505
        %v508 = vld [vmem:[%s388 + $0xc] sm:$0x1]
        %510 = vrot.lane.b32.xlu0 %v508, 88
        %v511 = vpop.permute.xlu0 %510
        %513 = vst.msk [vmem:[#allocation2 + $0x3] sm:$0x1] %vm494, %v511
        %v514 = vld [vmem:[%s388 + $0x5] sm:$0x1]
        %516 = vrot.lane.b32.xlu0 %v514, 104
        %v517 = vpop.permute.xlu0 %516
        %vm519 = vcmask 910144
        %520 = vst.msk [vmem:[#allocation2] sm:$0x1] %vm519, %v517
        %v521 = vld [vmem:[%s388 + $0x5] sm:$0x1]
        %523 = vrot.lane.b32.xlu0 %v521, 96
        %v524 = vpop.permute.xlu0 %523
        %526 = vst.msk [vmem:[#allocation2 + $0x1] sm:$0x1] %vm519, %v524
        %v527 = vld [vmem:[%s388 + $0xd] sm:$0x1]
        %529 = vrot.lane.b32.xlu0 %v527, 104
        %v530 = vpop.permute.xlu0 %529
        %532 = vst.msk [vmem:[#allocation2 + $0x2] sm:$0x1] %vm519, %v530
        %v533 = vld [vmem:[%s388 + $0xd] sm:$0x1]
        %535 = vrot.lane.b32.xlu0 %v533, 96
        %v536 = vpop.permute.xlu0 %535
        %538 = vst.msk [vmem:[#allocation2 + $0x3] sm:$0x1] %vm519, %v536
        %v539 = vld [vmem:[%s388 + $0x6] sm:$0x1]
        %541 = vrot.lane.b32.xlu0 %v539, 112
        %v542 = vpop.permute.xlu0 %541
        %vm544 = vcmask 975744
        %545 = vst.msk [vmem:[#allocation2] sm:$0x1] %vm544, %v542
        %v546 = vld [vmem:[%s388 + $0x6] sm:$0x1]
        %548 = vrot.lane.b32.xlu0 %v546, 104
        %v549 = vpop.permute.xlu0 %548
        %551 = vst.msk [vmem:[#allocation2 + $0x1] sm:$0x1] %vm544, %v549
        %v552 = vld [vmem:[%s388 + $0xe] sm:$0x1]
        %554 = vrot.lane.b32.xlu0 %v552, 112
        %v555 = vpop.permute.xlu0 %554
        %557 = vst.msk [vmem:[#allocation2 + $0x2] sm:$0x1] %vm544, %v555
        %v558 = vld [vmem:[%s388 + $0xe] sm:$0x1]
        %560 = vrot.lane.b32.xlu0 %v558, 104
        %v561 = vpop.permute.xlu0 %560
        %563 = vst.msk [vmem:[#allocation2 + $0x3] sm:$0x1] %vm544, %v561
        %v564 = vld [vmem:[%s388 + $0x7] sm:$0x1]
        %566 = vrot.lane.b32.xlu0 %v564, 120
        %v567 = vpop.permute.xlu0 %566
        %vm569 = vcmask 1041344
        %570 = vst.msk [vmem:[#allocation2] sm:$0x1] %vm569, %v567
        %v571 = vld [vmem:[%s388 + $0x7] sm:$0x1]
        %573 = vrot.lane.b32.xlu0 %v571, 112
        %v574 = vpop.permute.xlu0 %573
        %576 = vst.msk [vmem:[#allocation2 + $0x1] sm:$0x1] %vm569, %v574
        %v577 = vld [vmem:[%s388 + $0xf] sm:$0x1]
        %579 = vrot.lane.b32.xlu0 %v577, 120
        %v580 = vpop.permute.xlu0 %579
        %582 = vst.msk [vmem:[#allocation2 + $0x2] sm:$0x1] %vm569, %v580
        %v583 = vld [vmem:[%s388 + $0xf] sm:$0x1]
        %585 = vrot.lane.b32.xlu0 %v583, 112
        %v586 = vpop.permute.xlu0 %585
        %588 = vst.msk [vmem:[#allocation2 + $0x3] sm:$0x1] %vm569, %v586
        %s589 = scalar_lea.vmem %s177, 32 [#allocation3]
        %v590 = vld [vmem:[%s589] sm:$0x1]
        %591 = vst.msk [vmem:[#allocation2 + $0x4] sm:$0x1] %vm205, %v590
        %v592 = vld [vmem:[%s589] sm:$0x1]
        %594 = vrot.lane.b32.xlu0 %v592, 120
        %v595 = vpop.permute.xlu0 %594
        %597 = vst.msk [vmem:[#allocation2 + $0x5] sm:$0x1] %vm205, %v595
        %v598 = vld [vmem:[%s589 + $0x8] sm:$0x1]
        %599 = vst.msk [vmem:[#allocation2 + $0x6] sm:$0x1] %vm205, %v598
        %v600 = vld [vmem:[%s589 + $0x8] sm:$0x1]
        %602 = vrot.lane.b32.xlu0 %v600, 120
        %v603 = vpop.permute.xlu0 %602
        %605 = vst.msk [vmem:[#allocation2 + $0x7] sm:$0x1] %vm205, %v603
        %v606 = vld [vmem:[%s589 + $0x1] sm:$0x1]
        %608 = vrot.lane.b32.xlu0 %v606, 8
        %v609 = vpop.permute.xlu0 %608
        %611 = vst.msk [vmem:[#allocation2 + $0x4] sm:$0x1] %vm226, %v609
        %v612 = vld [vmem:[%s589 + $0x1] sm:$0x1]
        %613 = vst.msk [vmem:[#allocation2 + $0x5] sm:$0x1] %vm226, %v612
        %v614 = vld [vmem:[%s589 + $0x9] sm:$0x1]
        %616 = vrot.lane.b32.xlu0 %v614, 8
        %v617 = vpop.permute.xlu0 %616
        %619 = vst.msk [vmem:[#allocation2 + $0x6] sm:$0x1] %vm226, %v617
        %v620 = vld [vmem:[%s589 + $0x9] sm:$0x1]
        %621 = vst.msk [vmem:[#allocation2 + $0x7] sm:$0x1] %vm226, %v620
        %v622 = vld [vmem:[%s589 + $0x2] sm:$0x1]
        %624 = vrot.lane.b32.xlu0 %v622, 16
        %v625 = vpop.permute.xlu0 %624
        %627 = vst.msk [vmem:[#allocation2 + $0x4] sm:$0x1] %vm243, %v625
        %v628 = vld [vmem:[%s589 + $0x2] sm:$0x1]
        %630 = vrot.lane.b32.xlu0 %v628, 8
        %v631 = vpop.permute.xlu0 %630
        %633 = vst.msk [vmem:[#allocation2 + $0x5] sm:$0x1] %vm243, %v631
        %v634 = vld [vmem:[%s589 + $0xa] sm:$0x1]
        %636 = vrot.lane.b32.xlu0 %v634, 16
        %v637 = vpop.permute.xlu0 %636
        %639 = vst.msk [vmem:[#allocation2 + $0x6] sm:$0x1] %vm243, %v637
        %v640 = vld [vmem:[%s589 + $0xa] sm:$0x1]
        %642 = vrot.lane.b32.xlu0 %v640, 8
        %v643 = vpop.permute.xlu0 %642
        %645 = vst.msk [vmem:[#allocation2 + $0x7] sm:$0x1] %vm243, %v643
        %v646 = vld [vmem:[%s589 + $0x3] sm:$0x1]
        %648 = vrot.lane.b32.xlu0 %v646, 24
        %v649 = vpop.permute.xlu0 %648
        %651 = vst.msk [vmem:[#allocation2 + $0x4] sm:$0x1] %vm268, %v649
        %v652 = vld [vmem:[%s589 + $0x3] sm:$0x1]
        %654 = vrot.lane.b32.xlu0 %v652, 16
        %v655 = vpop.permute.xlu0 %654
        %657 = vst.msk [vmem:[#allocation2 + $0x5] sm:$0x1] %vm268, %v655
        %v658 = vld [vmem:[%s589 + $0xb] sm:$0x1]
        %660 = vrot.lane.b32.xlu0 %v658, 24
        %v661 = vpop.permute.xlu0 %660
        %663 = vst.msk [vmem:[#allocation2 + $0x6] sm:$0x1] %vm268, %v661
        %v664 = vld [vmem:[%s589 + $0xb] sm:$0x1]
        %666 = vrot.lane.b32.xlu0 %v664, 16
        %v667 = vpop.permute.xlu0 %666
        %669 = vst.msk [vmem:[#allocation2 + $0x7] sm:$0x1] %vm268, %v667
        %v670 = vld [vmem:[%s589 + $0x4] sm:$0x1]
        %672 = vrot.lane.b32.xlu0 %v670, 32
        %v673 = vpop.permute.xlu0 %672
        %675 = vst.msk [vmem:[#allocation2 + $0x4] sm:$0x1] %vm293, %v673
        %v676 = vld [vmem:[%s589 + $0x4] sm:$0x1]
        %678 = vrot.lane.b32.xlu0 %v676, 24
        %v679 = vpop.permute.xlu0 %678
        %681 = vst.msk [vmem:[#allocation2 + $0x5] sm:$0x1] %vm293, %v679
        %v682 = vld [vmem:[%s589 + $0xc] sm:$0x1]
        %684 = vrot.lane.b32.xlu0 %v682, 32
        %v685 = vpop.permute.xlu0 %684
        %687 = vst.msk [vmem:[#allocation2 + $0x6] sm:$0x1] %vm293, %v685
        %v688 = vld [vmem:[%s589 + $0xc] sm:$0x1]
        %690 = vrot.lane.b32.xlu0 %v688, 24
        %v691 = vpop.permute.xlu0 %690
        %693 = vst.msk [vmem:[#allocation2 + $0x7] sm:$0x1] %vm293, %v691
        %v694 = vld [vmem:[%s589 + $0x5] sm:$0x1]
        %696 = vrot.lane.b32.xlu0 %v694, 40
        %v697 = vpop.permute.xlu0 %696
        %699 = vst.msk [vmem:[#allocation2 + $0x4] sm:$0x1] %vm318, %v697
        %v700 = vld [vmem:[%s589 + $0x5] sm:$0x1]
        %702 = vrot.lane.b32.xlu0 %v700, 32
        %v703 = vpop.permute.xlu0 %702
        %705 = vst.msk [vmem:[#allocation2 + $0x5] sm:$0x1] %vm318, %v703
        %v706 = vld [vmem:[%s589 + $0xd] sm:$0x1]
        %708 = vrot.lane.b32.xlu0 %v706, 40
        %v709 = vpop.permute.xlu0 %708
        %711 = vst.msk [vmem:[#allocation2 + $0x6] sm:$0x1] %vm318, %v709
        %v712 = vld [vmem:[%s589 + $0xd] sm:$0x1]
        %714 = vrot.lane.b32.xlu0 %v712, 32
        %v715 = vpop.permute.xlu0 %714
        %717 = vst.msk [vmem:[#allocation2 + $0x7] sm:$0x1] %vm318, %v715
        %v718 = vld [vmem:[%s589 + $0x6] sm:$0x1]
        %720 = vrot.lane.b32.xlu0 %v718, 48
        %v721 = vpop.permute.xlu0 %720
        %723 = vst.msk [vmem:[#allocation2 + $0x4] sm:$0x1] %vm343, %v721
        %v724 = vld [vmem:[%s589 + $0x6] sm:$0x1]
        %726 = vrot.lane.b32.xlu0 %v724, 40
        %v727 = vpop.permute.xlu0 %726
        %729 = vst.msk [vmem:[#allocation2 + $0x5] sm:$0x1] %vm343, %v727
        %v730 = vld [vmem:[%s589 + $0xe] sm:$0x1]
        %732 = vrot.lane.b32.xlu0 %v730, 48
        %v733 = vpop.permute.xlu0 %732
        %735 = vst.msk [vmem:[#allocation2 + $0x6] sm:$0x1] %vm343, %v733
        %v736 = vld [vmem:[%s589 + $0xe] sm:$0x1]
        %738 = vrot.lane.b32.xlu0 %v736, 40
        %v739 = vpop.permute.xlu0 %738
        %741 = vst.msk [vmem:[#allocation2 + $0x7] sm:$0x1] %vm343, %v739
        %v742 = vld [vmem:[%s589 + $0x7] sm:$0x1]
        %744 = vrot.lane.b32.xlu0 %v742, 56
        %v745 = vpop.permute.xlu0 %744
        %747 = vst.msk [vmem:[#allocation2 + $0x4] sm:$0x1] %vm368, %v745
        %v748 = vld [vmem:[%s589 + $0x7] sm:$0x1]
        %750 = vrot.lane.b32.xlu0 %v748, 48
        %v751 = vpop.permute.xlu0 %750
        %753 = vst.msk [vmem:[#allocation2 + $0x5] sm:$0x1] %vm368, %v751
        %v754 = vld [vmem:[%s589 + $0xf] sm:$0x1]
        %756 = vrot.lane.b32.xlu0 %v754, 56
        %v757 = vpop.permute.xlu0 %756
        %759 = vst.msk [vmem:[#allocation2 + $0x6] sm:$0x1] %vm368, %v757
        %v760 = vld [vmem:[%s589 + $0xf] sm:$0x1]
        %762 = vrot.lane.b32.xlu0 %v760, 48
        %v763 = vpop.permute.xlu0 %762
        %765 = vst.msk [vmem:[#allocation2 + $0x7] sm:$0x1] %vm368, %v763
        %s766 = scalar_lea.vmem %s177, 48 [#allocation3]
        %v767 = vld [vmem:[%s766] sm:$0x1]
        %769 = vrot.lane.b32.xlu0 %v767, 64
        %v770 = vpop.permute.xlu0 %769
        %772 = vst.msk [vmem:[#allocation2 + $0x4] sm:$0x1] %vm394, %v770
        %v773 = vld [vmem:[%s766] sm:$0x1]
        %775 = vrot.lane.b32.xlu0 %v773, 56
        %v776 = vpop.permute.xlu0 %775
        %778 = vst.msk [vmem:[#allocation2 + $0x5] sm:$0x1] %vm394, %v776
        %v779 = vld [vmem:[%s766 + $0x8] sm:$0x1]
        %781 = vrot.lane.b32.xlu0 %v779, 64
        %v782 = vpop.permute.xlu0 %781
        %784 = vst.msk [vmem:[#allocation2 + $0x6] sm:$0x1] %vm394, %v782
        %v785 = vld [vmem:[%s766 + $0x8] sm:$0x1]
        %787 = vrot.lane.b32.xlu0 %v785, 56
        %v788 = vpop.permute.xlu0 %787
        %790 = vst.msk [vmem:[#allocation2 + $0x7] sm:$0x1] %vm394, %v788
        %v791 = vld [vmem:[%s766 + $0x1] sm:$0x1]
        %793 = vrot.lane.b32.xlu0 %v791, 72
        %v794 = vpop.permute.xlu0 %793
        %796 = vst.msk [vmem:[#allocation2 + $0x4] sm:$0x1] %vm419, %v794
        %v797 = vld [vmem:[%s766 + $0x1] sm:$0x1]
        %799 = vrot.lane.b32.xlu0 %v797, 64
        %v800 = vpop.permute.xlu0 %799
        %802 = vst.msk [vmem:[#allocation2 + $0x5] sm:$0x1] %vm419, %v800
        %v803 = vld [vmem:[%s766 + $0x9] sm:$0x1]
        %805 = vrot.lane.b32.xlu0 %v803, 72
        %v806 = vpop.permute.xlu0 %805
        %808 = vst.msk [vmem:[#allocation2 + $0x6] sm:$0x1] %vm419, %v806
        %v809 = vld [vmem:[%s766 + $0x9] sm:$0x1]
        %811 = vrot.lane.b32.xlu0 %v809, 64
        %v812 = vpop.permute.xlu0 %811
        %814 = vst.msk [vmem:[#allocation2 + $0x7] sm:$0x1] %vm419, %v812
        %v815 = vld [vmem:[%s766 + $0x2] sm:$0x1]
        %817 = vrot.lane.b32.xlu0 %v815, 80
        %v818 = vpop.permute.xlu0 %817
        %820 = vst.msk [vmem:[#allocation2 + $0x4] sm:$0x1] %vm444, %v818
        %v821 = vld [vmem:[%s766 + $0x2] sm:$0x1]
        %823 = vrot.lane.b32.xlu0 %v821, 72
        %v824 = vpop.permute.xlu0 %823
        %826 = vst.msk [vmem:[#allocation2 + $0x5] sm:$0x1] %vm444, %v824
        %v827 = vld [vmem:[%s766 + $0xa] sm:$0x1]
        %829 = vrot.lane.b32.xlu0 %v827, 80
        %v830 = vpop.permute.xlu0 %829
        %832 = vst.msk [vmem:[#allocation2 + $0x6] sm:$0x1] %vm444, %v830
        %v833 = vld [vmem:[%s766 + $0xa] sm:$0x1]
        %835 = vrot.lane.b32.xlu0 %v833, 72
        %v836 = vpop.permute.xlu0 %835
        %838 = vst.msk [vmem:[#allocation2 + $0x7] sm:$0x1] %vm444, %v836
        %v839 = vld [vmem:[%s766 + $0x3] sm:$0x1]
        %841 = vrot.lane.b32.xlu0 %v839, 88
        %v842 = vpop.permute.xlu0 %841
        %844 = vst.msk [vmem:[#allocation2 + $0x4] sm:$0x1] %vm469, %v842
        %v845 = vld [vmem:[%s766 + $0x3] sm:$0x1]
        %847 = vrot.lane.b32.xlu0 %v845, 80
        %v848 = vpop.permute.xlu0 %847
        %850 = vst.msk [vmem:[#allocation2 + $0x5] sm:$0x1] %vm469, %v848
        %v851 = vld [vmem:[%s766 + $0xb] sm:$0x1]
        %853 = vrot.lane.b32.xlu0 %v851, 88
        %v854 = vpop.permute.xlu0 %853
        %856 = vst.msk [vmem:[#allocation2 + $0x6] sm:$0x1] %vm469, %v854
        %v857 = vld [vmem:[%s766 + $0xb] sm:$0x1]
        %859 = vrot.lane.b32.xlu0 %v857, 80
        %v860 = vpop.permute.xlu0 %859
        %862 = vst.msk [vmem:[#allocation2 + $0x7] sm:$0x1] %vm469, %v860
        %v863 = vld [vmem:[%s766 + $0x4] sm:$0x1]
        %865 = vrot.lane.b32.xlu0 %v863, 96
        %v866 = vpop.permute.xlu0 %865
        %868 = vst.msk [vmem:[#allocation2 + $0x4] sm:$0x1] %vm494, %v866
        %v869 = vld [vmem:[%s766 + $0x4] sm:$0x1]
        %871 = vrot.lane.b32.xlu0 %v869, 88
        %v872 = vpop.permute.xlu0 %871
        %874 = vst.msk [vmem:[#allocation2 + $0x5] sm:$0x1] %vm494, %v872
        %v875 = vld [vmem:[%s766 + $0xc] sm:$0x1]
        %877 = vrot.lane.b32.xlu0 %v875, 96
        %v878 = vpop.permute.xlu0 %877
        %880 = vst.msk [vmem:[#allocation2 + $0x6] sm:$0x1] %vm494, %v878
        %v881 = vld [vmem:[%s766 + $0xc] sm:$0x1]
        %883 = vrot.lane.b32.xlu0 %v881, 88
        %v884 = vpop.permute.xlu0 %883
        %886 = vst.msk [vmem:[#allocation2 + $0x7] sm:$0x1] %vm494, %v884
        %v887 = vld [vmem:[%s766 + $0x5] sm:$0x1]
        %889 = vrot.lane.b32.xlu0 %v887, 104
        %v890 = vpop.permute.xlu0 %889
        %892 = vst.msk [vmem:[#allocation2 + $0x4] sm:$0x1] %vm519, %v890
        %v893 = vld [vmem:[%s766 + $0x5] sm:$0x1]
        %895 = vrot.lane.b32.xlu0 %v893, 96
        %v896 = vpop.permute.xlu0 %895
        %898 = vst.msk [vmem:[#allocation2 + $0x5] sm:$0x1] %vm519, %v896
        %v899 = vld [vmem:[%s766 + $0xd] sm:$0x1]
        %901 = vrot.lane.b32.xlu0 %v899, 104
        %v902 = vpop.permute.xlu0 %901
        %904 = vst.msk [vmem:[#allocation2 + $0x6] sm:$0x1] %vm519, %v902
        %v905 = vld [vmem:[%s766 + $0xd] sm:$0x1]
        %907 = vrot.lane.b32.xlu0 %v905, 96
        %v908 = vpop.permute.xlu0 %907
        %910 = vst.msk [vmem:[#allocation2 + $0x7] sm:$0x1] %vm519, %v908
        %v911 = vld [vmem:[%s766 + $0x6] sm:$0x1]
        %913 = vrot.lane.b32.xlu0 %v911, 112
        %v914 = vpop.permute.xlu0 %913
        %916 = vst.msk [vmem:[#allocation2 + $0x4] sm:$0x1] %vm544, %v914
        %v917 = vld [vmem:[%s766 + $0x6] sm:$0x1]
        %919 = vrot.lane.b32.xlu0 %v917, 104
        %v920 = vpop.permute.xlu0 %919
        %922 = vst.msk [vmem:[#allocation2 + $0x5] sm:$0x1] %vm544, %v920
        %v923 = vld [vmem:[%s766 + $0xe] sm:$0x1]
        %925 = vrot.lane.b32.xlu0 %v923, 112
        %v926 = vpop.permute.xlu0 %925
        %928 = vst.msk [vmem:[#allocation2 + $0x6] sm:$0x1] %vm544, %v926
        %v929 = vld [vmem:[%s766 + $0xe] sm:$0x1]
        %931 = vrot.lane.b32.xlu0 %v929, 104
        %v932 = vpop.permute.xlu0 %931
        %934 = vst.msk [vmem:[#allocation2 + $0x7] sm:$0x1] %vm544, %v932
        %v935 = vld [vmem:[%s766 + $0x7] sm:$0x1]
        %937 = vrot.lane.b32.xlu0 %v935, 120
        %v938 = vpop.permute.xlu0 %937
        %940 = vst.msk [vmem:[#allocation2 + $0x4] sm:$0x1] %vm569, %v938
        %v941 = vld [vmem:[%s766 + $0x7] sm:$0x1]
        %943 = vrot.lane.b32.xlu0 %v941, 112
        %v944 = vpop.permute.xlu0 %943
        %946 = vst.msk [vmem:[#allocation2 + $0x5] sm:$0x1] %vm569, %v944
        %v947 = vld [vmem:[%s766 + $0xf] sm:$0x1]
        %949 = vrot.lane.b32.xlu0 %v947, 120
        %v950 = vpop.permute.xlu0 %949
        %952 = vst.msk [vmem:[#allocation2 + $0x6] sm:$0x1] %vm569, %v950
        %v953 = vld [vmem:[%s766 + $0xf] sm:$0x1]
        %955 = vrot.lane.b32.xlu0 %v953, 112
        %v956 = vpop.permute.xlu0 %955
        %958 = vst.msk [vmem:[#allocation2 + $0x7] sm:$0x1] %vm569, %v956
        %v959 = vld [vmem:[#allocation2] sm:$0xff]
        %v961 = vcombine.high %v959, %v959
        %v963 = vpack.c.bf16 %v959, %v959
        %v964 = vpack.c.bf16 %v961, %v961
        %v965 = vld [vmem:[#allocation6] sm:$0xff]
        %v966 = vld [vmem:[#allocation6 + $0x8] sm:$0xff]
        %v967 = vld [vmem:[#allocation6 + $0x10] sm:$0xff]
        %v968 = vld [vmem:[#allocation6 + $0x18] sm:$0xff]
        %v969 = vld [vmem:[#allocation6 + $0x20] sm:$0xff]
        %v970 = vld [vmem:[#allocation6 + $0x28] sm:$0xff]
        %v971 = vld [vmem:[#allocation6 + $0x30] sm:$0xff]
        %v972 = vld [vmem:[#allocation6 + $0x38] sm:$0xff]
        %v973 = vld [vmem:[#allocation6 + $0x40] sm:$0xff]
        %v974 = vld [vmem:[#allocation6 + $0x48] sm:$0xff]
        %v975 = vld [vmem:[#allocation6 + $0x50] sm:$0xff]
        %v976 = vld [vmem:[#allocation6 + $0x58] sm:$0xff]
        %v977 = vld [vmem:[#allocation6 + $0x60] sm:$0xff]
        %v978 = vld [vmem:[#allocation6 + $0x68] sm:$0xff]
        %v979 = vld [vmem:[#allocation6 + $0x70] sm:$0xff]
        %v980 = vld [vmem:[#allocation6 + $0x78] sm:$0xff]
        %v981 = vld [vmem:[#allocation6 + $0x80] sm:$0xff]
        %v982 = vld [vmem:[#allocation6 + $0x88] sm:$0xff]
        %v983 = vld [vmem:[#allocation6 + $0x90] sm:$0xff]
        %v984 = vld [vmem:[#allocation6 + $0x98] sm:$0xff]
        %v985 = vld [vmem:[#allocation6 + $0xa0] sm:$0xff]
        %v986 = vld [vmem:[#allocation6 + $0xa8] sm:$0xff]
        %v987 = vld [vmem:[#allocation6 + $0xb0] sm:$0xff]
        %v988 = vld [vmem:[#allocation6 + $0xb8] sm:$0xff]
        %v989 = vld [vmem:[#allocation6 + $0xc0] sm:$0xff]
        %v990 = vld [vmem:[#allocation6 + $0xc8] sm:$0xff]
        %v991 = vld [vmem:[#allocation6 + $0xd0] sm:$0xff]
        %v992 = vld [vmem:[#allocation6 + $0xd8] sm:$0xff]
        %v993 = vld [vmem:[#allocation6 + $0xe0] sm:$0xff]
        %v994 = vld [vmem:[#allocation6 + $0xe8] sm:$0xff]
        %v995 = vld [vmem:[#allocation6 + $0xf0] sm:$0xff]
        %v996 = vld [vmem:[#allocation6 + $0xf8] sm:$0xff]
        %v997 = vld [vmem:[%s2] sm:$0x3]
        %v999 = vlaneseq
        %v1000 = vshrl.u32 %v999, 7
        %v1001 = vsub.s32 0, %v1000
        %v1002 = vrot.slane %v997, %v1001
        %v1003 = vlaneseq
        %v1004 = vshrl.u32 %v1003, 7
        %v1005 = vsub.s32 1, %v1004
        %v1006 = vrot.slane %v997, %v1005
        %v1041 = vunpack.c.l.b16 %v965
        %v1042 = vunpack.c.h.b16 %v965
        %v1043 = vunpack.c.l.b16 %v966
        %v1044 = vunpack.c.h.b16 %v966
        %v1045 = vunpack.c.l.b16 %v967
        %v1046 = vunpack.c.h.b16 %v967
        %v1047 = vunpack.c.l.b16 %v968
        %v1048 = vunpack.c.h.b16 %v968
        %v1049 = vunpack.c.l.b16 %v969
        %v1050 = vunpack.c.h.b16 %v969
        %v1051 = vunpack.c.l.b16 %v970
        %v1052 = vunpack.c.h.b16 %v970
        %v1053 = vunpack.c.l.b16 %v971
        %v1054 = vunpack.c.h.b16 %v971
        %v1055 = vunpack.c.l.b16 %v972
        %v1056 = vunpack.c.h.b16 %v972
        %v1057 = vunpack.c.l.b16 %v973
        %v1058 = vunpack.c.h.b16 %v973
        %v1059 = vunpack.c.l.b16 %v974
        %v1060 = vunpack.c.h.b16 %v974
        %v1061 = vunpack.c.l.b16 %v975
        %v1062 = vunpack.c.h.b16 %v975
        %v1063 = vunpack.c.l.b16 %v976
        %v1064 = vunpack.c.h.b16 %v976
        %v1065 = vunpack.c.l.b16 %v977
        %v1066 = vunpack.c.h.b16 %v977
        %v1067 = vunpack.c.l.b16 %v978
        %v1068 = vunpack.c.h.b16 %v978
        %v1069 = vunpack.c.l.b16 %v979
        %v1070 = vunpack.c.h.b16 %v979
        %v1071 = vunpack.c.l.b16 %v980
        %v1072 = vunpack.c.h.b16 %v980
        %v1073 = vunpack.c.l.b16 %v981
        %v1074 = vunpack.c.h.b16 %v981
        %v1075 = vunpack.c.l.b16 %v982
        %v1076 = vunpack.c.h.b16 %v982
        %v1077 = vunpack.c.l.b16 %v983
        %v1078 = vunpack.c.h.b16 %v983
        %v1079 = vunpack.c.l.b16 %v984
        %v1080 = vunpack.c.h.b16 %v984
        %v1081 = vunpack.c.l.b16 %v985
        %v1082 = vunpack.c.h.b16 %v985
        %v1083 = vunpack.c.l.b16 %v986
        %v1084 = vunpack.c.h.b16 %v986
        %v1085 = vunpack.c.l.b16 %v987
        %v1086 = vunpack.c.h.b16 %v987
        %v1087 = vunpack.c.l.b16 %v988
        %v1088 = vunpack.c.h.b16 %v988
        %v1089 = vunpack.c.l.b16 %v989
        %v1090 = vunpack.c.h.b16 %v989
        %v1091 = vunpack.c.l.b16 %v990
        %v1092 = vunpack.c.h.b16 %v990
        %v1093 = vunpack.c.l.b16 %v991
        %v1094 = vunpack.c.h.b16 %v991
        %v1095 = vunpack.c.l.b16 %v992
        %v1096 = vunpack.c.h.b16 %v992
        %v1097 = vunpack.c.l.b16 %v993
        %v1098 = vunpack.c.h.b16 %v993
        %v1099 = vunpack.c.l.b16 %v994
        %v1100 = vunpack.c.h.b16 %v994
        %v1101 = vunpack.c.l.b16 %v995
        %v1102 = vunpack.c.h.b16 %v995
        %v1103 = vunpack.c.l.b16 %v996
        %v1104 = vunpack.c.h.b16 %v996
        %v1105 = vpack.c.b16 %v1043, %v1041
        %v1106 = vpack.c.b16 %v1044, %v1042
        %v1107 = vpack.c.b16 %v1047, %v1045
        %v1108 = vpack.c.b16 %v1048, %v1046
        %v1109 = vpack.c.b16 %v1051, %v1049
        %v1110 = vpack.c.b16 %v1052, %v1050
        %v1111 = vpack.c.b16 %v1055, %v1053
        %v1112 = vpack.c.b16 %v1056, %v1054
        %v1113 = vpack.c.b16 %v1059, %v1057
        %v1114 = vpack.c.b16 %v1060, %v1058
        %v1115 = vpack.c.b16 %v1063, %v1061
        %v1116 = vpack.c.b16 %v1064, %v1062
        %v1117 = vpack.c.b16 %v1067, %v1065
        %v1118 = vpack.c.b16 %v1068, %v1066
        %v1119 = vpack.c.b16 %v1071, %v1069
        %v1120 = vpack.c.b16 %v1072, %v1070
        %v1121 = vpack.c.b16 %v1075, %v1073
        %v1122 = vpack.c.b16 %v1076, %v1074
        %v1123 = vpack.c.b16 %v1079, %v1077
        %v1124 = vpack.c.b16 %v1080, %v1078
        %v1125 = vpack.c.b16 %v1083, %v1081
        %v1126 = vpack.c.b16 %v1084, %v1082
        %v1127 = vpack.c.b16 %v1087, %v1085
        %v1128 = vpack.c.b16 %v1088, %v1086
        %v1129 = vpack.c.b16 %v1091, %v1089
        %v1130 = vpack.c.b16 %v1092, %v1090
        %v1131 = vpack.c.b16 %v1095, %v1093
        %v1132 = vpack.c.b16 %v1096, %v1094
        %v1133 = vpack.c.b16 %v1099, %v1097
        %v1134 = vpack.c.b16 %v1100, %v1098
        %v1135 = vpack.c.b16 %v1103, %v1101
        %v1136 = vpack.c.b16 %v1104, %v1102
        %1169 = vmatprep.subr.bf16.mxu0 %v1106
        %1170 = vmatpush1.bf16.msra.mxu0 %v1105
        %1171 = vmatprep.subr.bf16.mxu0 %v1108
        %1172 = vmatpush1.bf16.msra.mxu0 %v1107
        %1173 = vmatprep.subr.bf16.mxu0 %v1110
        %1174 = vmatpush1.bf16.msra.mxu0 %v1109
        %1175 = vmatprep.subr.bf16.mxu0 %v1112
        %1176 = vmatpush1.bf16.msra.mxu0 %v1111
        %1177 = vmatprep.subr.bf16.mxu0 %v1114
        %1178 = vmatpush1.bf16.msra.mxu0 %v1113
        %1179 = vmatprep.subr.bf16.mxu0 %v1116
        %1180 = vmatpush1.bf16.msra.mxu0 %v1115
        %1181 = vmatprep.subr.bf16.mxu0 %v1118
        %1182 = vmatpush1.bf16.msra.mxu0 %v1117
        %1183 = vmatprep.subr.bf16.mxu0 %v1120
        %1184 = vmatpush1.bf16.msra.mxu0 %v1119
        %1185 = vmatprep.subr.bf16.mxu0 %v1122
        %1186 = vmatpush1.bf16.msra.mxu0 %v1121
        %1187 = vmatprep.subr.bf16.mxu0 %v1124
        %1188 = vmatpush1.bf16.msra.mxu0 %v1123
        %1189 = vmatprep.subr.bf16.mxu0 %v1126
        %1190 = vmatpush1.bf16.msra.mxu0 %v1125
        %1191 = vmatprep.subr.bf16.mxu0 %v1128
        %1192 = vmatpush1.bf16.msra.mxu0 %v1127
        %1193 = vmatprep.subr.bf16.mxu0 %v1130
        %1194 = vmatpush1.bf16.msra.mxu0 %v1129
        %1195 = vmatprep.subr.bf16.mxu0 %v1132
        %1196 = vmatpush1.bf16.msra.mxu0 %v1131
        %1197 = vmatprep.subr.bf16.mxu0 %v1134
        %1198 = vmatpush1.bf16.msra.mxu0 %v1133
        %1199 = vmatprep.subr.bf16.mxu0 %v1136
        %1200 = vmatpush1.bf16.msra.mxu0 %v1135
        %1201 = vmatprep.mubr.bf16.mxu0 %v964
        %1202 = vmatmul.mubr.bf16.gmra.mrb[0].mxu0 %v963
        %v1203 = vpop.f32.mrb[0].mxu0
        %v1204 = vadd.f32 %v1002, %v1203
        %v1205 = vpop.f32.mrb[0].mxu0
        %v1206 = vadd.f32 %v1006, %v1205
        %v1207 = vpop.f32.mrb[0].mxu0
        %v1208 = vpop.f32.mrb[0].mxu0
        %1209 = vdwg.mxu0
        %v1212 = vcombine.low %v1204, %v1206
        %1214 = vst [vmem:[%s203] sm:$0xff] %v1212
        %s1215 = sand.u32 %s97, 1
        %s1216 = scalar_lea.sflag [#allocation5], %s1215
        %s1217 = sand.u32 %s97, 1
        %s1218 = smul.addr %s1217, 8
        %s1219 = scalar_lea.vmem [#allocation8], %s1218
        // Predicated region
        $region41: #{tpu_custom_call.1} parent=31 // pred_check
          %p1220 = pneg %p107
        $region42: #{tpu_custom_call.1} parent=31 // pred_check_branch
          %1222 = sbr.rel (%p1220) target = $region44
        $region43: #{tpu_custom_call.1} parent=31 // pred_region
          %s1224 = ssub.s32 128, 128
          %1225 = vsyncadd %s1216, %s1224
          %s1226 = smul.addr %s21, 2
          %s1227 = smul.addr %s1226, 64
          %s1228 = scalar_lea.hbm %s3, %s1227
          %s1230 = sshll.u32 %s1219, 4
          %s1231 = int_to_ptr.vmem [resolvable:$true] %s1230
          %1233 = dma.vmem_to_hbm [thread:$0]  %s1231, 128, %s1228, %s1216
        $region44: #{tpu_custom_call.1} parent=31 // pred_fallthru
          _
      $region32: #{tpu_custom_call.1} parent=5 // pred_fallthru
        _
      %p1234 = scmp.le.s32.totalorder 2, %s16
      // Predicated region
      $region45: #{tpu_custom_call.1} parent=5 // pred_check
        %p1235 = pneg %p1234
      $region46: #{tpu_custom_call.1} parent=5 // pred_check_branch
        %1237 = sbr.rel (%p1235) target = $region48
      $region47: #{tpu_custom_call.1} parent=5 // pred_region
        %s1238 = ssub.s32 %s16, 2
        // Predicated region
        $region49: #{tpu_custom_call.1} parent=47 // pred_check
          %p1239 = pneg %p113
        $region50: #{tpu_custom_call.1} parent=47 // pred_check_branch
          %1241 = sbr.rel (%p1239) target = $region52
        $region51: #{tpu_custom_call.1} parent=47 // pred_region
          %s1242 = sand.u32 %s98, 1
          %s1243 = scalar_lea.sflag [#allocation5], %s1242
          %s1244 = sand.u32 %s98, 1
          %s1245 = smul.addr %s1244, 8
          %s1246 = scalar_lea.vmem [#allocation8], %s1245
          %1247 = dma.done %s1243, 128
        $region52: #{tpu_custom_call.1} parent=47 // pred_fallthru
          _
      $region48: #{tpu_custom_call.1} parent=5 // pred_fallthru
        _
    $region6: #{tpu_custom_call.1} parent=1 // loop_footer
      %s20 = sadd.s32 1, %s16
    $region7: #{tpu_custom_call.1} parent=1 // loop_footer_branch
      %15 = sbr.rel target = $region3
    $region8: #{tpu_custom_call.1} parent=1 // loop_exit
      _
    %1248 = vsyncpa [#allocation4], 1
    %s1249 = scalar_lea.sflag [#allocation4], 1
    %1250 = vsyncpa %s1249, 1
    %1251 = vsyncpa [#allocation7], 1
    %1252 = vsyncpa [#allocation5], 1
    %s1253 = scalar_lea.sflag [#allocation5], 1
    %1254 = vsyncpa %s1253, 1

</llo_original>
